<compile_context>
chip_gen: v5e
topology: v5e:2x2
jax: 0.10.0
libtpu: 0.0.40
codegen_flags: <defaults>
</compile_context>

<pallas_src>
import jax
import jax.numpy as jnp
from jax.experimental import pallas as pl
from jax.experimental.pallas import tpu as pltpu


def _lrelu(x, slope=0.01):
    return jnp.where(x >= 0, x, slope * x)


def cd_kernel(idx_ref, mask_ref, h_lrn_aug_ref, w_p_aug_ref, d_aug_ref, out_ref):
    f32 = jnp.float32
    bf16 = jnp.bfloat16

    idx = idx_ref[...]                      # (TL, S) int32
    mask = mask_ref[...]                    # (TL, S) f32

    # ---- learner-side DTR: one MXU pass -> p_aug (TL, C+1) ------------------
    # h_lrn_aug = [h_lrn | 1], w_p_aug packs [w_lrn ; a_cpt_p + bp] plus a
    # column that yields exactly 1 after leaky_relu (folds beta into MIRT).
    p_aug = _lrelu(jnp.dot(h_lrn_aug_ref[...], w_p_aug_ref[...],
                           preferred_element_type=f32))           # (TL, C+1)

    # ---- MIRT: V[l, n] = p_lrn[l] . d_scn[n] + beta[n] ----------------------
    V = jnp.dot(p_aug.astype(bf16), d_aug_ref[...],
                preferred_element_type=f32)                        # (TL, N) f32

    # ---- gather V[l, idx[l, s]]: f32 VPU masked select + lane reduce --------
    n = V.shape[1]
    iota_n = jax.lax.broadcasted_iota(jnp.int32, (1, 1, n), 2)     # (1,1,N)
    sel = jnp.where(iota_n == idx[:, :, None], V[:, None, :], 0.0) # (TL,S,N) f32
    gathered = jnp.sum(sel, axis=-1)                               # (TL, S)

    out_ref[...] = jax.nn.sigmoid(gathered) * mask


def _round_up(x, m):
    return ((x + m - 1) // m) * m


def _pick_tile_l(L, S, N, C, D, budget_bytes=24 * 1024 * 1024):
    """Learner-tile size from a lane/sublane-padding-aware VMEM model.

    Default budget is conservative enough for v7x (64 MiB / TensorCore); on
    v5e/v6e (128 MiB VMEM) pass a larger budget for bigger tiles / fewer grid
    steps.
    """
    n_pad = _round_up(N, 128)
    s_sub = _round_up(S, 8)            # sublane padding of the select stage
    s_lane = _round_up(S, 128)         # lane padding of idx/mask/out tiles
    c_pad = _round_up(C + 1, 128)
    d_pad = _round_up(D + 1, 128)
    per_row = (
        2 * s_sub * n_pad * 4          # (TL,S,N) compare mask + selected f32
        + n_pad * 4                    # V row, f32
        + c_pad * (4 + 2)              # p_aug f32 + bf16 MXU copy
        + 2 * d_pad * 2                # h_lrn_aug tile, bf16, double-buffered
        + 2 * 3 * s_lane * 4           # idx/mask/out tiles, double-buffered
    )
    fixed = c_pad * n_pad * 2 + d_pad * c_pad * 2 + (2 << 20)  # residents + slack
    tl = (budget_bytes - fixed) // max(per_row, 1)
    return int(max(8, min(tl, 1024, L)))


def cd_forward(scn_seq_index, scn_seq_mask, h_lrn, h_scn, h_cpt, params,
               tile_l=None, vmem_budget_bytes=None):
    """params: dict with wp (1,2D), bp (1,), wd (1,2D), bd (1,), wb (1,D), bb (1,)."""
    f32 = jnp.float32
    bf16 = jnp.bfloat16

    L, D = h_lrn.shape
    N = h_scn.shape[0]
    C = h_cpt.shape[0]
    S = scn_seq_index.shape[1]

    wp = params["wp"].astype(f32)
    wd = params["wd"].astype(f32)
    wb = params["wb"].astype(f32)
    bp = params["bp"].reshape(()).astype(f32)
    bd = params["bd"].reshape(()).astype(f32)
    bb = params["bb"].reshape(()).astype(f32)

    h_lrn = h_lrn.astype(f32)
    h_scn = h_scn.astype(f32)
    h_cpt = h_cpt.astype(f32)

    # ---- L-invariant DTR terms hoisted out of the grid loop (runs once) -----
    a_cpt_p = (h_cpt @ wp[:, D:].T)[:, 0]             # (C,)
    a_cpt_d = (h_cpt @ wd[:, D:].T)[:, 0]             # (C,)
    a_scn_d = (h_scn @ wd[:, :D].T)[:, 0]             # (N,)
    beta = _lrelu((h_scn @ wb.T)[:, 0] + bb)          # (N,)
    d_scn_t = _lrelu(a_cpt_d[:, None] + a_scn_d[None, :] + bd)       # (C, N)
    d_aug = jnp.concatenate([d_scn_t, beta[None, :]], axis=0).astype(bf16)  # (C+1, N)

    # Augmented learner weights: columns 0..C-1 carry [w_lrn ; a_cpt_p + bp],
    # column C carries e_D so its pre-activation is exactly 1.0 (-> ones
    # column in p_aug after leaky_relu, folding beta into the MIRT matmul).
    w_p_aug = jnp.zeros((D + 1, C + 1), f32)
    w_p_aug = w_p_aug.at[:D, :C].set(jnp.broadcast_to(wp[:, :D].T, (D, C)))
    w_p_aug = w_p_aug.at[D, :C].set(a_cpt_p + bp)
    w_p_aug = w_p_aug.at[D, C].set(1.0)
    w_p_aug = w_p_aug.astype(bf16)

    h_lrn_aug = jnp.concatenate([h_lrn, jnp.ones((L, 1), f32)], axis=1).astype(bf16)

    # ---- tiling over learners ------------------------------------------------
    if tile_l is None:
        tile_l = _pick_tile_l(L, S, N, C, D,
                              budget_bytes=vmem_budget_bytes or 24 * 1024 * 1024)
    tile_l = int(max(1, min(tile_l, L)))
    if tile_l < L:
        tile_l = min(L, max(8, (tile_l // 8) * 8))   # multiple of 8 unless full L
    grid = (pl.cdiv(L, tile_l),)

    in_specs = [
        pl.BlockSpec((tile_l, S), lambda i: (i, 0)),        # scn_seq_index
        pl.BlockSpec((tile_l, S), lambda i: (i, 0)),        # scn_seq_mask
        pl.BlockSpec((tile_l, D + 1), lambda i: (i, 0)),    # h_lrn_aug (tiled)
        pl.BlockSpec((D + 1, C + 1), lambda i: (0, 0)),     # w_p_aug  (resident)
        pl.BlockSpec((C + 1, N), lambda i: (0, 0)),         # d_aug    (resident)
    ]
    out_specs = pl.BlockSpec((tile_l, S), lambda i: (i, 0))

    return pl.pallas_call(
        cd_kernel,
        out_shape=jax.ShapeDtypeStruct((L, S), jnp.float32),
        grid=grid,
        in_specs=in_specs,
        out_specs=out_specs,
        compiler_params=pltpu.CompilerParams(
            dimension_semantics=("parallel",),
            vmem_limit_bytes=48 * 1024 * 1024),
    )(scn_seq_index.astype(jnp.int32),
      scn_seq_mask.astype(f32),
      h_lrn_aug, w_p_aug, d_aug)


def cd_reference(scn_seq_index, scn_seq_mask, h_lrn, h_scn, h_cpt, params):
    """Pure-JAX f32 replica of the PyTorch module, for validation."""
    L, D = h_lrn.shape
    N = h_scn.shape[0]
    C = h_cpt.shape[0]
    h_lrn_cpt = jnp.concatenate(
        [jnp.repeat(h_lrn, C, axis=0), jnp.tile(h_cpt, (L, 1))], axis=1)
    h_scn_cpt = jnp.concatenate(
        [jnp.repeat(h_scn, C, axis=0), jnp.tile(h_cpt, (N, 1))], axis=1)
    p_lrn = jax.nn.leaky_relu(h_lrn_cpt @ params["wp"].T + params["bp"], 0.01)[:, 0]
    d_scn = jax.nn.leaky_relu(h_scn_cpt @ params["wd"].T + params["bd"], 0.01)[:, 0]
    beta = jax.nn.leaky_relu(h_scn @ params["wb"].T + params["bb"], 0.01)[:, 0]
    p_lrn = p_lrn.reshape(L, C)
    d_scn = d_scn.reshape(N, C)
    d_g = d_scn[scn_seq_index]           # (L, S, C)
    b_g = beta[scn_seq_index]            # (L, S)
    out = jnp.einsum("bic,bc->bi", d_g, p_lrn) + b_g
    return jax.nn.sigmoid(out) * scn_seq_mask


if __name__ == "__main__":
    key = jax.random.PRNGKey(0)
    D = 32          # embedding_dim
    L = 32          # lrn_num
    N = 24          # scn_num
    C = 12          # cpt_num
    S = 16          # sequence length

    ks = jax.random.split(key, 12)
    h_lrn = jax.random.normal(ks[0], (L, D), jnp.float32)
    h_scn = jax.random.normal(ks[1], (N, D), jnp.float32)
    h_cpt = jax.random.normal(ks[2], (C, D), jnp.float32)
    scn_seq_index = jax.random.randint(ks[3], (L, S), 0, N, jnp.int32)
    scn_seq_mask = (jax.random.uniform(ks[4], (L, S)) > 0.2).astype(jnp.float32)

    # Deterministic Linear parameter init (uniform +-1/sqrt(fan_in), like nn.Linear).
    lim2 = 1.0 / jnp.sqrt(2.0 * D)
    lim1 = 1.0 / jnp.sqrt(1.0 * D)
    params = {
        "wp": jax.random.uniform(ks[5], (1, 2 * D), jnp.float32, -lim2, lim2),
        "bp": jax.random.uniform(ks[6], (1,), jnp.float32, -lim2, lim2),
        "wd": jax.random.uniform(ks[7], (1, 2 * D), jnp.float32, -lim2, lim2),
        "bd": jax.random.uniform(ks[8], (1,), jnp.float32, -lim2, lim2),
        "wb": jax.random.uniform(ks[9], (1, D), jnp.float32, -lim1, lim1),
        "bb": jax.random.uniform(ks[10], (1,), jnp.float32, -lim1, lim1),
    }

    # tile_l=16 -> grid of 2 learner tiles, exercises the pipelined/parallel path.
    out = cd_forward(scn_seq_index, scn_seq_mask, h_lrn, h_scn, h_cpt, params,
                     tile_l=16)
    out = jax.block_until_ready(out)

    ref = cd_reference(scn_seq_index, scn_seq_mask, h_lrn, h_scn, h_cpt, params)
    assert out.shape == (L, S)
    # bf16 MXU operands with f32 accumulation; gather/select stays f32.
    assert jnp.allclose(out, ref, atol=1e-2, rtol=1e-2), "mismatch vs reference"

    print("KERNEL_OK")
</pallas_src>

<mosaic_0001>
module attributes {stable_mosaic.version = 11 : i64} {
  func.func @cd_kernel(%arg0: i32, %arg1: memref<16x16xi32, #tpu.memory_space<vmem>>, %arg2: memref<16x16xf32, #tpu.memory_space<vmem>>, %arg3: memref<16x33xbf16, #tpu.memory_space<vmem>>, %arg4: memref<33x13xbf16, #tpu.memory_space<vmem>>, %arg5: memref<13x24xbf16, #tpu.memory_space<vmem>>, %arg6: memref<16x16xf32, #tpu.memory_space<vmem>>) attributes {dimension_semantics = [#tpu.dimension_semantics<parallel>], iteration_bounds = array<i64: 2>, scalar_prefetch = 0 : i64, scratch_operands = 0 : i64, tpu.core_type = #tpu.core_type<tc>, window_params = [{transform_indices = @transform_0, window_bounds = array<i64: 16, 16>}, {transform_indices = @transform_1, window_bounds = array<i64: 16, 16>}, {transform_indices = @transform_2, window_bounds = array<i64: 16, 33>}, {pipeline_mode = #tpu.pipeline_mode<synchronous>, transform_indices = @transform_3, window_bounds = array<i64: 33, 13>}, {pipeline_mode = #tpu.pipeline_mode<synchronous>, transform_indices = @transform_4, window_bounds = array<i64: 13, 24>}, {transform_indices = @transform_5, window_bounds = array<i64: 16, 16>}]} {
    %c0 = arith.constant 0 : index
    %c0_0 = arith.constant 0 : index
    %0 = vector.load %arg1[%c0, %c0_0] : memref<16x16xi32, #tpu.memory_space<vmem>>, vector<16x16xi32>
    %c0_1 = arith.constant 0 : index
    %c0_2 = arith.constant 0 : index
    %1 = vector.load %arg2[%c0_1, %c0_2] : memref<16x16xf32, #tpu.memory_space<vmem>>, vector<16x16xf32>
    %c0_3 = arith.constant 0 : index
    %c0_4 = arith.constant 0 : index
    %2 = vector.load %arg3[%c0_3, %c0_4] : memref<16x33xbf16, #tpu.memory_space<vmem>>, vector<16x33xbf16>
    %c0_5 = arith.constant 0 : index
    %c0_6 = arith.constant 0 : index
    %3 = vector.load %arg4[%c0_5, %c0_6] : memref<33x13xbf16, #tpu.memory_space<vmem>>, vector<33x13xbf16>
    %cst = arith.constant dense<0.000000e+00> : vector<16x13xf32>
    %4 = tpu.matmul %2, %3, %cst {dimension_numbers = #tpu.dot_dimension_numbers<[1], [0], [0], [1], [0, 0, 1, 1], [], []>} : vector<16x33xbf16>, vector<33x13xbf16>, vector<16x13xf32> -> vector<16x13xf32>
    %cst_7 = arith.constant 0.000000e+00 : f32
    %5 = vector.broadcast %cst_7 : f32 to vector<16x13xf32>
    %6 = arith.cmpf oge, %4, %5 : vector<16x13xf32>
    %cst_8 = arith.constant 0.00999999977 : f32
    %7 = vector.broadcast %cst_8 : f32 to vector<16x13xf32>
    %8 = arith.mulf %7, %4 : vector<16x13xf32>
    %9 = arith.select %6, %4, %8 : vector<16x13xi1>, vector<16x13xf32>
    %10 = arith.truncf %9 : vector<16x13xf32> to vector<16x13xbf16>
    %c0_9 = arith.constant 0 : index
    %c0_10 = arith.constant 0 : index
    %11 = vector.load %arg5[%c0_9, %c0_10] : memref<13x24xbf16, #tpu.memory_space<vmem>>, vector<13x24xbf16>
    %cst_11 = arith.constant dense<0.000000e+00> : vector<16x24xf32>
    %12 = tpu.matmul %10, %11, %cst_11 {dimension_numbers = #tpu.dot_dimension_numbers<[1], [0], [0], [1], [0, 0, 1, 1], [], []>} : vector<16x13xbf16>, vector<13x24xbf16>, vector<16x24xf32> -> vector<16x24xf32>
    %13 = tpu.iota {dimensions = array<i32: 2>} : vector<1x1x24xi32>
    %14 = vector.shape_cast %0 : vector<16x16xi32> to vector<16x16x1xi32>
    %15 = vector.broadcast %13 : vector<1x1x24xi32> to vector<16x16x24xi32>
    %16 = vector.broadcast %14 : vector<16x16x1xi32> to vector<16x16x24xi32>
    %17 = arith.cmpi eq, %15, %16 : vector<16x16x24xi32>
    %18 = vector.shape_cast %12 : vector<16x24xf32> to vector<16x1x24xf32>
    %cst_12 = arith.constant 0.000000e+00 : f32
    %19 = vector.shape_cast %18 : vector<16x1x24xf32> to vector<16x1x24xf32>
    %20 = vector.broadcast %19 : vector<16x1x24xf32> to vector<16x16x24xf32>
    %21 = vector.broadcast %cst_12 : f32 to vector<16x16x24xf32>
    %22 = arith.select %17, %20, %21 : vector<16x16x24xi1>, vector<16x16x24xf32>
    %cst_13 = arith.constant dense<0.000000e+00> : vector<16x16xf32>
    %23 = vector.multi_reduction <add>, %22, %cst_13 [2] : vector<16x16x24xf32> to vector<16x16xf32>
    %24 = arith.negf %23 : vector<16x16xf32>
    %25 = math.exp %24 : vector<16x16xf32>
    %cst_14 = arith.constant 1.000000e+00 : f32
    %26 = vector.broadcast %cst_14 : f32 to vector<16x16xf32>
    %27 = arith.addf %26, %25 : vector<16x16xf32>
    %28 = arith.divf %26, %27 : vector<16x16xf32>
    %29 = arith.mulf %28, %1 : vector<16x16xf32>
    %c0_15 = arith.constant 0 : index
    %c0_16 = arith.constant 0 : index
    %30 = vector.load %arg6[%c0_15, %c0_16] : memref<16x16xf32, #tpu.memory_space<vmem>>, vector<16x16xf32>
    tpu.vector_store %arg6[%c0_15, %c0_16], %29 {strides = array<i32>} : memref<16x16xf32, #tpu.memory_space<vmem>>, vector<16x16xf32>,
    return
  }
  func.func @transform_0(%arg0: i32) -> (i32, i32) {
    %c0_i32 = arith.constant 0 : i32
    %c0_i32_0 = arith.constant 0 : i32
    return %arg0, %c0_i32 : i32, i32
  }
  func.func @transform_1(%arg0: i32) -> (i32, i32) {
    %c0_i32 = arith.constant 0 : i32
    %c0_i32_0 = arith.constant 0 : i32
    return %arg0, %c0_i32 : i32, i32
  }
  func.func @transform_2(%arg0: i32) -> (i32, i32) {
    %c0_i32 = arith.constant 0 : i32
    %c0_i32_0 = arith.constant 0 : i32
    return %arg0, %c0_i32 : i32, i32
  }
  func.func @transform_3(%arg0: i32) -> (i32, i32) {
    %c0_i32 = arith.constant 0 : i32
    %c0_i32_0 = arith.constant 0 : i32
    %c0_i32_1 = arith.constant 0 : i32
    return %c0_i32, %c0_i32_0 : i32, i32
  }
  func.func @transform_4(%arg0: i32) -> (i32, i32) {
    %c0_i32 = arith.constant 0 : i32
    %c0_i32_0 = arith.constant 0 : i32
    %c0_i32_1 = arith.constant 0 : i32
    return %c0_i32, %c0_i32_0 : i32, i32
  }
  func.func @transform_5(%arg0: i32) -> (i32, i32) {
    %c0_i32 = arith.constant 0 : i32
    %c0_i32_0 = arith.constant 0 : i32
    return %arg0, %c0_i32 : i32, i32
  }
}

</mosaic_0001>

<llo_original>
// kernel: tpu_custom_call.1
$region0: #{tpu_custom_call.1}
  #allocation0 [shape = 'u32[]', space=smem, size = 0x4, offset = 0x4, fixed_abs, tag = 'smem constant byte address 0x4 - core index']
  #allocation1 [shape = 'u32[72,128]{1,0:T(1,128)}', space=vmem, size = 0x9000, scoped, tag = 'internal scratch']
  %s0 = inlined_call_operand.vmem [shape: s32[32,16], index: 0, kind: input, shape index: {}]
  %s1 = inlined_call_operand.vmem [shape: f32[32,16], index: 1, kind: input, shape index: {}]
  %s2 = inlined_call_operand.vmem [shape: bf16[32,33], index: 2, kind: input, shape index: {}]
  %s3 = inlined_call_operand.vmem [shape: bf16[33,13], index: 3, kind: input, shape index: {}]
  %s4 = inlined_call_operand.vmem [shape: bf16[13,24], index: 4, kind: input, shape index: {}]
  %s5 = inlined_call_operand.vmem [shape: f32[32,16], index: 5, kind: output, shape index: {}]
  %s6 = sld [smem:[#allocation0]]
  $region53: #{tpu_custom_call.1} parent=0
    _
  %s8 = ssub.s32 1, %s6
  %s9 = scalar_select 0, %s8, %s6
  loop: start=0, step=1, limit=4
  $region2: #{tpu_custom_call.1} parent=0 // loop_pre_header
    _
  $region3: #{tpu_custom_call.1} parent=0 // loop_header
    %s11 = sphi 0, %s15
    %p12 = scmp.ge.s32.totalorder %s11, 4
    %s21 = sphi 0, %s23
    %s24 = sphi 0, %s21
    %s25 = sphi 0, %s24
    %s41 = sphi 0, %s25
    %s47 = sphi 0, %s49
    %s50 = sphi 0, %s47
    %s51 = sphi 0, %s50
    %s67 = sphi 0, %s51
    %s73 = sphi 0, %s75
    %s76 = sphi 0, %s73
    %s77 = sphi 0, %s76
    %s93 = sphi 0, %s77
    %s97 = sphi 0, %s97
    %s99 = sphi 0, %s97
    %s100 = sphi 0, %s99
    %s114 = sphi 0, %s100
    %s118 = sphi 0, %s118
    %s120 = sphi 0, %s118
    %s121 = sphi 0, %s120
    %s135 = sphi 0, %s121
    %s141 = sphi 0, %s143
    %s144 = sphi 0, %s141
    %s145 = sphi 0, %s144
    %s161 = sphi 0, %s145
  $region4: #{tpu_custom_call.1} parent=0 // loop_header_branch
    %14 = sbr.rel (%p12) target = $region8
  $region5: #{tpu_custom_call.1} parent=0 // loop_body
    %s16 = ssub.s32 %s11, 1
    %s17 = ssub.s32 %s11, 2
    %s18 = sadd.s32 %s11, 1
    %s19 = ssub.s32 %s11, %s18
    %p20 = scmp.eq.s32.totalorder %s19, 0
    %s22 = sadd.s32 %s21, 1
    %s23 = scalar_select %p20, %s21, %s22
    %p26 = pneg %p20
    %p27 = scmp.eq.s32.totalorder %s11, 1
    %p28 = por %p26, %p27
    %p29 = scmp.ne.s32.totalorder %s21, %s24
    %p30 = scmp.eq.s32.totalorder %s11, 0
    %p31 = por %p29, %p30
    %p32 = scmp.ne.s32.totalorder %s21, %s24
    %p33 = scmp.eq.s32.totalorder %s16, 1
    %p34 = por %p32, %p33
    %p35 = scmp.ne.s32.totalorder %s24, %s25
    %p36 = scmp.eq.s32.totalorder %s16, 0
    %p37 = por %p35, %p36
    %p38 = scmp.ne.s32.totalorder %s24, %s25
    %p39 = scmp.eq.s32.totalorder %s17, 1
    %p40 = por %p38, %p39
    %p42 = scmp.ne.s32.totalorder %s25, %s41
    %p43 = scmp.eq.s32.totalorder %s17, 0
    %p44 = por %p42, %p43
    %s45 = ssub.s32 %s11, %s18
    %p46 = scmp.eq.s32.totalorder %s45, 0
    %s48 = sadd.s32 %s47, 1
    %s49 = scalar_select %p46, %s47, %s48
    %p52 = pneg %p46
    %p53 = scmp.eq.s32.totalorder %s11, 1
    %p54 = por %p52, %p53
    %p55 = scmp.ne.s32.totalorder %s47, %s50
    %p56 = scmp.eq.s32.totalorder %s11, 0
    %p57 = por %p55, %p56
    %p58 = scmp.ne.s32.totalorder %s47, %s50
    %p59 = scmp.eq.s32.totalorder %s16, 1
    %p60 = por %p58, %p59
    %p61 = scmp.ne.s32.totalorder %s50, %s51
    %p62 = scmp.eq.s32.totalorder %s16, 0
    %p63 = por %p61, %p62
    %p64 = scmp.ne.s32.totalorder %s50, %s51
    %p65 = scmp.eq.s32.totalorder %s17, 1
    %p66 = por %p64, %p65
    %p68 = scmp.ne.s32.totalorder %s51, %s67
    %p69 = scmp.eq.s32.totalorder %s17, 0
    %p70 = por %p68, %p69
    %s71 = ssub.s32 %s11, %s18
    %p72 = scmp.eq.s32.totalorder %s71, 0
    %s74 = sadd.s32 %s73, 1
    %s75 = scalar_select %p72, %s73, %s74
    %p78 = pneg %p72
    %p79 = scmp.eq.s32.totalorder %s11, 1
    %p80 = por %p78, %p79
    %p81 = scmp.ne.s32.totalorder %s73, %s76
    %p82 = scmp.eq.s32.totalorder %s11, 0
    %p83 = por %p81, %p82
    %p84 = scmp.ne.s32.totalorder %s73, %s76
    %p85 = scmp.eq.s32.totalorder %s16, 1
    %p86 = por %p84, %p85
    %p87 = scmp.ne.s32.totalorder %s76, %s77
    %p88 = scmp.eq.s32.totalorder %s16, 0
    %p89 = por %p87, %p88
    %p90 = scmp.ne.s32.totalorder %s76, %s77
    %p91 = scmp.eq.s32.totalorder %s17, 1
    %p92 = por %p90, %p91
    %p94 = scmp.ne.s32.totalorder %s77, %s93
    %p95 = scmp.eq.s32.totalorder %s17, 0
    %p96 = por %p94, %p95
    %s98 = sadd.s32 %s97, 1
    %p101 = scmp.eq.s32.totalorder %s11, 1
    %p102 = scmp.ne.s32.totalorder %s97, %s99
    %p103 = scmp.eq.s32.totalorder %s11, 0
    %p104 = por %p102, %p103
    %p105 = scmp.ne.s32.totalorder %s97, %s99
    %p106 = scmp.eq.s32.totalorder %s16, 1
    %p107 = por %p105, %p106
    %p108 = scmp.ne.s32.totalorder %s99, %s100
    %p109 = scmp.eq.s32.totalorder %s16, 0
    %p110 = por %p108, %p109
    %p111 = scmp.ne.s32.totalorder %s99, %s100
    %p112 = scmp.eq.s32.totalorder %s17, 1
    %p113 = por %p111, %p112
    %p115 = scmp.ne.s32.totalorder %s100, %s114
    %p116 = scmp.eq.s32.totalorder %s17, 0
    %p117 = por %p115, %p116
    %s119 = sadd.s32 %s118, 1
    %p122 = scmp.eq.s32.totalorder %s11, 1
    %p123 = scmp.ne.s32.totalorder %s118, %s120
    %p124 = scmp.eq.s32.totalorder %s11, 0
    %p125 = por %p123, %p124
    %p126 = scmp.ne.s32.totalorder %s118, %s120
    %p127 = scmp.eq.s32.totalorder %s16, 1
    %p128 = por %p126, %p127
    %p129 = scmp.ne.s32.totalorder %s120, %s121
    %p130 = scmp.eq.s32.totalorder %s16, 0
    %p131 = por %p129, %p130
    %p132 = scmp.ne.s32.totalorder %s120, %s121
    %p133 = scmp.eq.s32.totalorder %s17, 1
    %p134 = por %p132, %p133
    %p136 = scmp.ne.s32.totalorder %s121, %s135
    %p137 = scmp.eq.s32.totalorder %s17, 0
    %p138 = por %p136, %p137
    %s139 = ssub.s32 %s11, %s18
    %p140 = scmp.eq.s32.totalorder %s139, 0
    %s142 = sadd.s32 %s141, 1
    %s143 = scalar_select %p140, %s141, %s142
    %p146 = pneg %p140
    %p147 = scmp.eq.s32.totalorder %s11, 1
    %p148 = por %p146, %p147
    %p149 = scmp.ne.s32.totalorder %s141, %s144
    %p150 = scmp.eq.s32.totalorder %s11, 0
    %p151 = por %p149, %p150
    %p152 = scmp.ne.s32.totalorder %s141, %s144
    %p153 = scmp.eq.s32.totalorder %s16, 1
    %p154 = por %p152, %p153
    %p155 = scmp.ne.s32.totalorder %s144, %s145
    %p156 = scmp.eq.s32.totalorder %s16, 0
    %p157 = por %p155, %p156
    %p158 = scmp.ne.s32.totalorder %s144, %s145
    %p159 = scmp.eq.s32.totalorder %s17, 1
    %p160 = por %p158, %p159
    %p162 = scmp.ne.s32.totalorder %s145, %s161
    %p163 = scmp.eq.s32.totalorder %s17, 0
    %p164 = por %p162, %p163
    %p165 = scmp.le.s32.totalorder 1, %s11
    %p166 = scmp.lt.s32.totalorder %s11, 3
    %p167 = pnand %p165, %p166
    %p168 = pneg %p167
    // Predicated region
    $region9: #{tpu_custom_call.1} parent=5 // pred_check
      _
    $region10: #{tpu_custom_call.1} parent=5 // pred_check_branch
      %170 = sbr.rel (%p167) target = $region12
    $region11: #{tpu_custom_call.1} parent=5 // pred_region
      %s171 = ssub.s32 %s11, 1
      // Predicated region
      $region13: #{tpu_custom_call.1} parent=11 // pred_check
        %p172 = pneg %p110
      $region14: #{tpu_custom_call.1} parent=11 // pred_check_branch
        %174 = sbr.rel (%p172) target = $region16
      $region15: #{tpu_custom_call.1} parent=11 // pred_region
        _
      $region16: #{tpu_custom_call.1} parent=11 // pred_fallthru
        _
      // Predicated region
      $region17: #{tpu_custom_call.1} parent=11 // pred_check
        %p175 = pneg %p131
      $region18: #{tpu_custom_call.1} parent=11 // pred_check_branch
        %177 = sbr.rel (%p175) target = $region20
      $region19: #{tpu_custom_call.1} parent=11 // pred_region
        _
      $region20: #{tpu_custom_call.1} parent=11 // pred_fallthru
        _
    $region12: #{tpu_custom_call.1} parent=5 // pred_fallthru
      _
    %p178 = scmp.lt.s32.totalorder %s11, 2
    // Predicated region
    $region21: #{tpu_custom_call.1} parent=5 // pred_check
      %p179 = pneg %p178
    $region22: #{tpu_custom_call.1} parent=5 // pred_check_branch
      %181 = sbr.rel (%p179) target = $region24
    $region23: #{tpu_custom_call.1} parent=5 // pred_region
      // Predicated region
      $region25: #{tpu_custom_call.1} parent=23 // pred_check
        %p182 = pneg %p31
      $region26: #{tpu_custom_call.1} parent=23 // pred_check_branch
        %184 = sbr.rel (%p182) target = $region28
      $region27: #{tpu_custom_call.1} parent=23 // pred_region
        %s185 = smul.u32 2, %s11
        %p186 = scmp.lt.s32.totalorder %s185, 3
        %s187 = scalar_select %p186, %s185, 3
        %s188 = smul.addr %s187, 8
        %s189 = scalar_lea.vmem %s0, %s188
        %s190 = smul.u32 2, %s11
      $region28: #{tpu_custom_call.1} parent=23 // pred_fallthru
        _
      // Predicated region
      $region29: #{tpu_custom_call.1} parent=23 // pred_check
        %p191 = pneg %p57
      $region30: #{tpu_custom_call.1} parent=23 // pred_check_branch
        %193 = sbr.rel (%p191) target = $region32
      $region31: #{tpu_custom_call.1} parent=23 // pred_region
        %s194 = smul.u32 2, %s11
        %p195 = scmp.lt.s32.totalorder %s194, 3
        %s196 = scalar_select %p195, %s194, 3
        %s197 = smul.addr %s196, 8
        %s198 = scalar_lea.vmem %s1, %s197
        %s199 = smul.u32 2, %s11
      $region32: #{tpu_custom_call.1} parent=23 // pred_fallthru
        _
      // Predicated region
      $region33: #{tpu_custom_call.1} parent=23 // pred_check
        %p200 = pneg %p83
      $region34: #{tpu_custom_call.1} parent=23 // pred_check_branch
        %202 = sbr.rel (%p200) target = $region36
      $region35: #{tpu_custom_call.1} parent=23 // pred_region
        %s203 = smul.u32 2, %s11
        %p204 = scmp.lt.s32.totalorder %s203, 3
        %s205 = scalar_select %p204, %s203, 3
        %s206 = smul.addr %s205, 4
        %s207 = scalar_lea.vmem %s2, %s206
        %s208 = smul.u32 2, %s11
      $region36: #{tpu_custom_call.1} parent=23 // pred_fallthru
        _
    $region24: #{tpu_custom_call.1} parent=5 // pred_fallthru
      _
    %p209 = scmp.le.s32.totalorder 1, %s11
    %p210 = scmp.lt.s32.totalorder %s11, 3
    %p211 = pnand %p209, %p210
    %p212 = pneg %p211
    // Predicated region
    $region37: #{tpu_custom_call.1} parent=5 // pred_check
      _
    $region38: #{tpu_custom_call.1} parent=5 // pred_check_branch
      %214 = sbr.rel (%p211) target = $region40
    $region39: #{tpu_custom_call.1} parent=5 // pred_region
      %s215 = ssub.s32 %s11, 1
      %s216 = smul.u32 2, %s16
      %p217 = scmp.lt.s32.totalorder %s216, 3
      %s218 = scalar_select %p217, %s216, 3
      %s219 = smul.addr %s218, 8
      %s220 = scalar_lea.vmem %s0, %s219
      %p221 = pneg %p37
      %p222 = pneg %p34
      %s223 = smul.u32 2, %s16
      %p224 = scmp.lt.s32.totalorder %s223, 3
      %s225 = scalar_select %p224, %s223, 3
      %s226 = smul.addr %s225, 8
      %s227 = scalar_lea.vmem %s1, %s226
      %p228 = pneg %p63
      %p229 = pneg %p60
      %s230 = smul.u32 2, %s16
      %p231 = scmp.lt.s32.totalorder %s230, 3
      %s232 = scalar_select %p231, %s230, 3
      %s233 = smul.addr %s232, 4
      %s234 = scalar_lea.vmem %s2, %s233
      %p235 = pneg %p89
      %p236 = pneg %p86
      %p237 = pneg %p110
      %p238 = pneg %p107
      %p239 = pneg %p131
      %p240 = pneg %p128
      %p241 = pneg %p157
      %p242 = pneg %p154
      %s243 = smul.u32 2, %s16
      %p244 = scmp.lt.s32.totalorder %s243, 3
      %s245 = scalar_select %p244, %s243, 3
      %s246 = smul.addr %s245, 8
      %s247 = scalar_lea.vmem %s5, %s246
      %s248 = smul.u32 2, %s16
      %p249 = scmp.lt.s32.totalorder %s248, 3
      %s250 = scalar_select %p249, %s248, 3
      %s251 = smul.addr %s250, 8
      %s252 = scalar_lea.vmem %s0, %s251
      %s253 = smul.u32 2, %s16
      %s254 = smul.u32 2, %s16
      %p255 = scmp.lt.s32.totalorder %s254, 3
      %s256 = scalar_select %p255, %s254, 3
      %s257 = smul.addr %s256, 8
      %s258 = scalar_lea.vmem %s1, %s257
      %s259 = smul.u32 2, %s16
      %s260 = smul.u32 2, %s16
      %p261 = scmp.lt.s32.totalorder %s260, 3
      %s262 = scalar_select %p261, %s260, 3
      %s263 = smul.addr %s262, 4
      %s264 = scalar_lea.vmem %s2, %s263
      %s265 = smul.u32 2, %s16
      %s266 = smul.u32 2, %s16
      %p267 = scmp.lt.s32.totalorder %s266, 3
      %s268 = scalar_select %p267, %s266, 3
      %s269 = smul.addr %s268, 8
      %s270 = scalar_lea.vmem %s5, %s269
      %s271 = smul.u32 2, %s16
      %v273 = vld [vmem:[%s252] sm:$0xff]
      %v274 = vld [vmem:[%s252 + $0x8] sm:$0xff]
      %v275 = vld [vmem:[%s258] sm:$0xff]
      %v276 = vld [vmem:[%s258 + $0x8] sm:$0xff]
      %v277 = vld [vmem:[%s264] sm:$0xf]
      %v278 = vld [vmem:[%s264 + $0x4] sm:$0xf]
      %v279 = vld [vmem:[%s3] sm:$0xf]
      %v280 = vld [vmem:[%s3 + $0x4] sm:$0xf]
      %v281 = vld [vmem:[%s3 + $0x8] sm:$0xf]
      %v282 = vld [vmem:[%s3 + $0xc] sm:$0xf]
      %v283 = vld [vmem:[%s3 + $0x10] sm:$0x1]
      %v286 = vunpack.c.l.b16 %v277
      %v287 = vunpack.c.l.b16 %v278
      %v288 = vpack.c.b16 %v287, %v286
      %v294 = vunpack.c.l.b16 %v279
      %v295 = vunpack.c.l.b16 %v280
      %v296 = vunpack.c.l.b16 %v281
      %v297 = vunpack.c.l.b16 %v282
      %v298 = vunpack.c.l.b16 %v283
      %v299 = vpack.c.b16 %v295, %v294
      %v300 = vpack.c.b16 %v297, %v296
      %v301 = vpack.c.b16 %v298, %v298
      %vm304 = vcmask 269312
      %v306 = vsel %vm304, %v288, 0
      %vm308 = vcmask 1040384
      %v309 = vsel 0, 4294967295, 65535
      %v310 = vsel %vm308, %v309, 0
      %v312 = vand.u32 %v301, %v310
      %314 = vmatpush.bf16.msra.mxu0 0
      %315 = vmatpush.bf16.msra.mxu0 0
      %316 = vmatpush.bf16.msra.mxu0 0
      %317 = vmatpush.bf16.msra.mxu0 0
      %318 = vmatpush.bf16.msra.mxu0 0
      %319 = vmatpush.bf16.msra.mxu0 %v312
      %320 = vmatpush.bf16.msra.mxu0 %v300
      %321 = vmatpush.bf16.msra.mxu0 %v299
      %322 = vmatmul.bf16.gmra.mxu0 %v306
      %v323 = vpop.f32.mrf.mxu0
      %v324 = vadd.f32 0.0, %v323
      %v325 = vpop.f32.mrf.mxu0
      %v326 = vadd.f32 0.0, %v325
      %327 = vdwg.mxu0
      %vm328 = vcmp.ge.f32.partialorder %v324, 0.0
      %vm329 = vcmp.ge.f32.partialorder %v326, 0.0
      %v330 = vmul.f32 %v324, 0.01
      %v331 = vmul.f32 %v326, 0.01
      %v332 = vsel %vm328, %v324, %v330
      %v333 = vsel %vm329, %v326, %v331
      %v334 = vpack.c.bf16 %v333, %v332
      %v335 = vld [vmem:[%s4] sm:$0xf]
      %v336 = vld [vmem:[%s4 + $0x4] sm:$0x7]
      %v339 = vunpack.c.l.b16 %v335
      %v340 = vunpack.c.l.b16 %v336
      %v341 = vpack.c.b16 %v340, %v339
      %vm342 = vcmask 105472
      %v344 = vsel %vm342, %v334, 0
      %vm346 = vcmask 1045504
      %vm347 = vcmask 1046528
      %v348 = vsel %vm346, 4294967295, 65535
      %v349 = vsel %vm347, %v348, 0
      %v351 = vand.u32 %v341, %v349
      %353 = vmatpush.bf16.msra.mxu0 0
      %354 = vmatpush.bf16.msra.mxu0 0
      %355 = vmatpush.bf16.msra.mxu0 0
      %356 = vmatpush.bf16.msra.mxu0 0
      %357 = vmatpush.bf16.msra.mxu0 0
      %358 = vmatpush.bf16.msra.mxu0 0
      %359 = vmatpush.bf16.msra.mxu0 0
      %360 = vmatpush.bf16.msra.mxu0 %v351
      %361 = vmatmul.bf16.gmra.mxu0 %v344
      %v362 = vpop.f32.mrf.mxu0
      %v363 = vadd.f32 0.0, %v362
      %v364 = vpop.f32.mrf.mxu0
      %v365 = vadd.f32 0.0, %v364
      %366 = vdwg.mxu0
      %v367 = vlaneseq
      %v368 = vand.u32 %v367, 127
      %v369 = vperm.slane %v273, 0
      %v370 = vlaneseq
      %v371 = vshrl.u32 %v370, 7
      %373 = vset.pattern.permute.xlu0 %v371
      %374 = vperm.xlu0 %373, %v369
      %v375 = vpop.permute.xlu0 %374
      %v376 = vlaneseq
      %v377 = vshrl.u32 %v376, 7
      %v378 = vadd.s32 %v377, 8
      %379 = vset.pattern.permute.xlu0 %v378
      %380 = vperm.xlu0 %379, %v369
      %v381 = vpop.permute.xlu0 %380
      %v382 = vperm.slane %v273, 1
      %v383 = vlaneseq
      %v384 = vshrl.u32 %v383, 7
      %386 = vset.pattern.permute.xlu0 %v384
      %387 = vperm.xlu0 %386, %v382
      %v388 = vpop.permute.xlu0 %387
      %v389 = vlaneseq
      %v390 = vshrl.u32 %v389, 7
      %v391 = vadd.s32 %v390, 8
      %392 = vset.pattern.permute.xlu0 %v391
      %393 = vperm.xlu0 %392, %v382
      %v394 = vpop.permute.xlu0 %393
      %v395 = vperm.slane %v273, 2
      %v396 = vlaneseq
      %v397 = vshrl.u32 %v396, 7
      %399 = vset.pattern.permute.xlu0 %v397
      %400 = vperm.xlu0 %399, %v395
      %v401 = vpop.permute.xlu0 %400
      %v402 = vlaneseq
      %v403 = vshrl.u32 %v402, 7
      %v404 = vadd.s32 %v403, 8
      %405 = vset.pattern.permute.xlu0 %v404
      %406 = vperm.xlu0 %405, %v395
      %v407 = vpop.permute.xlu0 %406
      %v408 = vperm.slane %v273, 3
      %v409 = vlaneseq
      %v410 = vshrl.u32 %v409, 7
      %412 = vset.pattern.permute.xlu0 %v410
      %413 = vperm.xlu0 %412, %v408
      %v414 = vpop.permute.xlu0 %413
      %v415 = vlaneseq
      %v416 = vshrl.u32 %v415, 7
      %v417 = vadd.s32 %v416, 8
      %418 = vset.pattern.permute.xlu0 %v417
      %419 = vperm.xlu0 %418, %v408
      %v420 = vpop.permute.xlu0 %419
      %v421 = vperm.slane %v273, 4
      %v422 = vlaneseq
      %v423 = vshrl.u32 %v422, 7
      %425 = vset.pattern.permute.xlu0 %v423
      %426 = vperm.xlu0 %425, %v421
      %v427 = vpop.permute.xlu0 %426
      %v428 = vlaneseq
      %v429 = vshrl.u32 %v428, 7
      %v430 = vadd.s32 %v429, 8
      %431 = vset.pattern.permute.xlu0 %v430
      %432 = vperm.xlu0 %431, %v421
      %v433 = vpop.permute.xlu0 %432
      %v434 = vperm.slane %v273, 5
      %v435 = vlaneseq
      %v436 = vshrl.u32 %v435, 7
      %438 = vset.pattern.permute.xlu0 %v436
      %439 = vperm.xlu0 %438, %v434
      %v440 = vpop.permute.xlu0 %439
      %v441 = vlaneseq
      %v442 = vshrl.u32 %v441, 7
      %v443 = vadd.s32 %v442, 8
      %444 = vset.pattern.permute.xlu0 %v443
      %445 = vperm.xlu0 %444, %v434
      %v446 = vpop.permute.xlu0 %445
      %v447 = vperm.slane %v273, 6
      %v448 = vlaneseq
      %v449 = vshrl.u32 %v448, 7
      %451 = vset.pattern.permute.xlu0 %v449
      %452 = vperm.xlu0 %451, %v447
      %v453 = vpop.permute.xlu0 %452
      %v454 = vlaneseq
      %v455 = vshrl.u32 %v454, 7
      %v456 = vadd.s32 %v455, 8
      %457 = vset.pattern.permute.xlu0 %v456
      %458 = vperm.xlu0 %457, %v447
      %v459 = vpop.permute.xlu0 %458
      %v460 = vperm.slane %v273, 7
      %v461 = vlaneseq
      %v462 = vshrl.u32 %v461, 7
      %464 = vset.pattern.permute.xlu0 %v462
      %465 = vperm.xlu0 %464, %v460
      %v466 = vpop.permute.xlu0 %465
      %v467 = vlaneseq
      %v468 = vshrl.u32 %v467, 7
      %v469 = vadd.s32 %v468, 8
      %470 = vset.pattern.permute.xlu0 %v469
      %471 = vperm.xlu0 %470, %v460
      %v472 = vpop.permute.xlu0 %471
      %v473 = vperm.slane %v274, 0
      %v474 = vlaneseq
      %v475 = vshrl.u32 %v474, 7
      %477 = vset.pattern.permute.xlu0 %v475
      %478 = vperm.xlu0 %477, %v473
      %v479 = vpop.permute.xlu0 %478
      %v480 = vlaneseq
      %v481 = vshrl.u32 %v480, 7
      %v482 = vadd.s32 %v481, 8
      %483 = vset.pattern.permute.xlu0 %v482
      %484 = vperm.xlu0 %483, %v473
      %v485 = vpop.permute.xlu0 %484
      %v486 = vperm.slane %v274, 1
      %v487 = vlaneseq
      %v488 = vshrl.u32 %v487, 7
      %490 = vset.pattern.permute.xlu0 %v488
      %491 = vperm.xlu0 %490, %v486
      %v492 = vpop.permute.xlu0 %491
      %v493 = vlaneseq
      %v494 = vshrl.u32 %v493, 7
      %v495 = vadd.s32 %v494, 8
      %496 = vset.pattern.permute.xlu0 %v495
      %497 = vperm.xlu0 %496, %v486
      %v498 = vpop.permute.xlu0 %497
      %v499 = vperm.slane %v274, 2
      %v500 = vlaneseq
      %v501 = vshrl.u32 %v500, 7
      %503 = vset.pattern.permute.xlu0 %v501
      %504 = vperm.xlu0 %503, %v499
      %v505 = vpop.permute.xlu0 %504
      %v506 = vlaneseq
      %v507 = vshrl.u32 %v506, 7
      %v508 = vadd.s32 %v507, 8
      %509 = vset.pattern.permute.xlu0 %v508
      %510 = vperm.xlu0 %509, %v499
      %v511 = vpop.permute.xlu0 %510
      %v512 = vperm.slane %v274, 3
      %v513 = vlaneseq
      %v514 = vshrl.u32 %v513, 7
      %516 = vset.pattern.permute.xlu0 %v514
      %517 = vperm.xlu0 %516, %v512
      %v518 = vpop.permute.xlu0 %517
      %v519 = vlaneseq
      %v520 = vshrl.u32 %v519, 7
      %v521 = vadd.s32 %v520, 8
      %522 = vset.pattern.permute.xlu0 %v521
      %523 = vperm.xlu0 %522, %v512
      %v524 = vpop.permute.xlu0 %523
      %v525 = vperm.slane %v274, 4
      %v526 = vlaneseq
      %v527 = vshrl.u32 %v526, 7
      %529 = vset.pattern.permute.xlu0 %v527
      %530 = vperm.xlu0 %529, %v525
      %v531 = vpop.permute.xlu0 %530
      %v532 = vlaneseq
      %v533 = vshrl.u32 %v532, 7
      %v534 = vadd.s32 %v533, 8
      %535 = vset.pattern.permute.xlu0 %v534
      %536 = vperm.xlu0 %535, %v525
      %v537 = vpop.permute.xlu0 %536
      %v538 = vperm.slane %v274, 5
      %v539 = vlaneseq
      %v540 = vshrl.u32 %v539, 7
      %542 = vset.pattern.permute.xlu0 %v540
      %543 = vperm.xlu0 %542, %v538
      %v544 = vpop.permute.xlu0 %543
      %v545 = vlaneseq
      %v546 = vshrl.u32 %v545, 7
      %v547 = vadd.s32 %v546, 8
      %548 = vset.pattern.permute.xlu0 %v547
      %549 = vperm.xlu0 %548, %v538
      %v550 = vpop.permute.xlu0 %549
      %v551 = vperm.slane %v274, 6
      %v552 = vlaneseq
      %v553 = vshrl.u32 %v552, 7
      %555 = vset.pattern.permute.xlu0 %v553
      %556 = vperm.xlu0 %555, %v551
      %v557 = vpop.permute.xlu0 %556
      %v558 = vlaneseq
      %v559 = vshrl.u32 %v558, 7
      %v560 = vadd.s32 %v559, 8
      %561 = vset.pattern.permute.xlu0 %v560
      %562 = vperm.xlu0 %561, %v551
      %v563 = vpop.permute.xlu0 %562
      %v564 = vperm.slane %v274, 7
      %v565 = vlaneseq
      %v566 = vshrl.u32 %v565, 7
      %568 = vset.pattern.permute.xlu0 %v566
      %569 = vperm.xlu0 %568, %v564
      %v570 = vpop.permute.xlu0 %569
      %v571 = vlaneseq
      %v572 = vshrl.u32 %v571, 7
      %v573 = vadd.s32 %v572, 8
      %574 = vset.pattern.permute.xlu0 %v573
      %575 = vperm.xlu0 %574, %v564
      %v576 = vpop.permute.xlu0 %575
      %vm577 = vcmp.eq.s32.totalorder %v368, %v375
      %vm578 = vcmp.eq.s32.totalorder %v368, %v381
      %vm579 = vcmp.eq.s32.totalorder %v368, %v388
      %vm580 = vcmp.eq.s32.totalorder %v368, %v394
      %vm581 = vcmp.eq.s32.totalorder %v368, %v401
      %vm582 = vcmp.eq.s32.totalorder %v368, %v407
      %vm583 = vcmp.eq.s32.totalorder %v368, %v414
      %vm584 = vcmp.eq.s32.totalorder %v368, %v420
      %vm585 = vcmp.eq.s32.totalorder %v368, %v427
      %vm586 = vcmp.eq.s32.totalorder %v368, %v433
      %vm587 = vcmp.eq.s32.totalorder %v368, %v440
      %vm588 = vcmp.eq.s32.totalorder %v368, %v446
      %vm589 = vcmp.eq.s32.totalorder %v368, %v453
      %vm590 = vcmp.eq.s32.totalorder %v368, %v459
      %vm591 = vcmp.eq.s32.totalorder %v368, %v466
      %vm592 = vcmp.eq.s32.totalorder %v368, %v472
      %vm593 = vcmp.eq.s32.totalorder %v368, %v479
      %vm594 = vcmp.eq.s32.totalorder %v368, %v485
      %vm595 = vcmp.eq.s32.totalorder %v368, %v492
      %vm596 = vcmp.eq.s32.totalorder %v368, %v498
      %vm597 = vcmp.eq.s32.totalorder %v368, %v505
      %vm598 = vcmp.eq.s32.totalorder %v368, %v511
      %vm599 = vcmp.eq.s32.totalorder %v368, %v518
      %vm600 = vcmp.eq.s32.totalorder %v368, %v524
      %vm601 = vcmp.eq.s32.totalorder %v368, %v531
      %vm602 = vcmp.eq.s32.totalorder %v368, %v537
      %vm603 = vcmp.eq.s32.totalorder %v368, %v544
      %vm604 = vcmp.eq.s32.totalorder %v368, %v550
      %vm605 = vcmp.eq.s32.totalorder %v368, %v557
      %vm606 = vcmp.eq.s32.totalorder %v368, %v563
      %vm607 = vcmp.eq.s32.totalorder %v368, %v570
      %vm608 = vcmp.eq.s32.totalorder %v368, %v576
      %v611 = vrot.slane %v363, 1
      %v612 = vrot.slane %v363, 2
      %v613 = vrot.slane %v363, 3
      %v614 = vrot.slane %v363, 4
      %v615 = vrot.slane %v363, 5
      %v616 = vrot.slane %v363, 6
      %v617 = vrot.slane %v363, 7
      %v618 = vrot.slane %v365, 1
      %v619 = vrot.slane %v365, 2
      %v620 = vrot.slane %v365, 3
      %v621 = vrot.slane %v365, 4
      %v622 = vrot.slane %v365, 5
      %v623 = vrot.slane %v365, 6
      %v624 = vrot.slane %v365, 7
      %v625 = vperm.slane %v363, 0
      %v626 = vperm.slane %v611, 0
      %v627 = vperm.slane %v612, 0
      %v628 = vperm.slane %v613, 0
      %v629 = vperm.slane %v614, 0
      %v630 = vperm.slane %v615, 0
      %v631 = vperm.slane %v616, 0
      %v632 = vperm.slane %v617, 0
      %v633 = vperm.slane %v365, 0
      %v634 = vperm.slane %v618, 0
      %v635 = vperm.slane %v619, 0
      %v636 = vperm.slane %v620, 0
      %v637 = vperm.slane %v621, 0
      %v638 = vperm.slane %v622, 0
      %v639 = vperm.slane %v623, 0
      %v640 = vperm.slane %v624, 0
      %v657 = vsel %vm577, %v625, 0.0
      %v658 = vsel %vm578, %v625, 0.0
      %v659 = vsel %vm579, %v626, 0.0
      %v660 = vsel %vm580, %v626, 0.0
      %v661 = vsel %vm581, %v627, 0.0
      %v662 = vsel %vm582, %v627, 0.0
      %v663 = vsel %vm583, %v628, 0.0
      %v664 = vsel %vm584, %v628, 0.0
      %v665 = vsel %vm585, %v629, 0.0
      %v666 = vsel %vm586, %v629, 0.0
      %v667 = vsel %vm587, %v630, 0.0
      %v668 = vsel %vm588, %v630, 0.0
      %v669 = vsel %vm589, %v631, 0.0
      %v670 = vsel %vm590, %v631, 0.0
      %v671 = vsel %vm591, %v632, 0.0
      %v672 = vsel %vm592, %v632, 0.0
      %v673 = vsel %vm593, %v633, 0.0
      %v674 = vsel %vm594, %v633, 0.0
      %v675 = vsel %vm595, %v634, 0.0
      %v676 = vsel %vm596, %v634, 0.0
      %v677 = vsel %vm597, %v635, 0.0
      %v678 = vsel %vm598, %v635, 0.0
      %v679 = vsel %vm599, %v636, 0.0
      %v680 = vsel %vm600, %v636, 0.0
      %v681 = vsel %vm601, %v637, 0.0
      %v682 = vsel %vm602, %v637, 0.0
      %v683 = vsel %vm603, %v638, 0.0
      %v684 = vsel %vm604, %v638, 0.0
      %v685 = vsel %vm605, %v639, 0.0
      %v686 = vsel %vm606, %v639, 0.0
      %v687 = vsel %vm607, %v640, 0.0
      %v688 = vsel %vm608, %v640, 0.0
      %vm689 = vcmask 195584
      %v690 = vsel %vm689, %v657, 0.0
      %691 = vadd.xlane.f32.xlu0 %v690
      %v692 = vpop.xlane.xlu0 %691
      %v693 = vsel %vm689, %v658, 0.0
      %694 = vadd.xlane.f32.xlu0 %v693
      %v695 = vpop.xlane.xlu0 %694
      %v696 = vsel %vm689, %v659, 0.0
      %697 = vadd.xlane.f32.xlu0 %v696
      %v698 = vpop.xlane.xlu0 %697
      %v699 = vsel %vm689, %v660, 0.0
      %700 = vadd.xlane.f32.xlu0 %v699
      %v701 = vpop.xlane.xlu0 %700
      %v702 = vsel %vm689, %v661, 0.0
      %703 = vadd.xlane.f32.xlu0 %v702
      %v704 = vpop.xlane.xlu0 %703
      %v705 = vsel %vm689, %v662, 0.0
      %706 = vadd.xlane.f32.xlu0 %v705
      %v707 = vpop.xlane.xlu0 %706
      %v708 = vsel %vm689, %v663, 0.0
      %709 = vadd.xlane.f32.xlu0 %v708
      %v710 = vpop.xlane.xlu0 %709
      %v711 = vsel %vm689, %v664, 0.0
      %712 = vadd.xlane.f32.xlu0 %v711
      %v713 = vpop.xlane.xlu0 %712
      %v714 = vsel %vm689, %v665, 0.0
      %715 = vadd.xlane.f32.xlu0 %v714
      %v716 = vpop.xlane.xlu0 %715
      %v717 = vsel %vm689, %v666, 0.0
      %718 = vadd.xlane.f32.xlu0 %v717
      %v719 = vpop.xlane.xlu0 %718
      %v720 = vsel %vm689, %v667, 0.0
      %721 = vadd.xlane.f32.xlu0 %v720
      %v722 = vpop.xlane.xlu0 %721
      %v723 = vsel %vm689, %v668, 0.0
      %724 = vadd.xlane.f32.xlu0 %v723
      %v725 = vpop.xlane.xlu0 %724
      %v726 = vsel %vm689, %v669, 0.0
      %727 = vadd.xlane.f32.xlu0 %v726
      %v728 = vpop.xlane.xlu0 %727
      %v729 = vsel %vm689, %v670, 0.0
      %730 = vadd.xlane.f32.xlu0 %v729
      %v731 = vpop.xlane.xlu0 %730
      %v732 = vsel %vm689, %v671, 0.0
      %733 = vadd.xlane.f32.xlu0 %v732
      %v734 = vpop.xlane.xlu0 %733
      %v735 = vsel %vm689, %v672, 0.0
      %736 = vadd.xlane.f32.xlu0 %v735
      %v737 = vpop.xlane.xlu0 %736
      %v738 = vsel %vm689, %v673, 0.0
      %739 = vadd.xlane.f32.xlu0 %v738
      %v740 = vpop.xlane.xlu0 %739
      %v741 = vsel %vm689, %v674, 0.0
      %742 = vadd.xlane.f32.xlu0 %v741
      %v743 = vpop.xlane.xlu0 %742
      %v744 = vsel %vm689, %v675, 0.0
      %745 = vadd.xlane.f32.xlu0 %v744
      %v746 = vpop.xlane.xlu0 %745
      %v747 = vsel %vm689, %v676, 0.0
      %748 = vadd.xlane.f32.xlu0 %v747
      %v749 = vpop.xlane.xlu0 %748
      %v750 = vsel %vm689, %v677, 0.0
      %751 = vadd.xlane.f32.xlu0 %v750
      %v752 = vpop.xlane.xlu0 %751
      %v753 = vsel %vm689, %v678, 0.0
      %754 = vadd.xlane.f32.xlu0 %v753
      %v755 = vpop.xlane.xlu0 %754
      %v756 = vsel %vm689, %v679, 0.0
      %757 = vadd.xlane.f32.xlu0 %v756
      %v758 = vpop.xlane.xlu0 %757
      %v759 = vsel %vm689, %v680, 0.0
      %760 = vadd.xlane.f32.xlu0 %v759
      %v761 = vpop.xlane.xlu0 %760
      %v762 = vsel %vm689, %v681, 0.0
      %763 = vadd.xlane.f32.xlu0 %v762
      %v764 = vpop.xlane.xlu0 %763
      %v765 = vsel %vm689, %v682, 0.0
      %766 = vadd.xlane.f32.xlu0 %v765
      %v767 = vpop.xlane.xlu0 %766
      %v768 = vsel %vm689, %v683, 0.0
      %769 = vadd.xlane.f32.xlu0 %v768
      %v770 = vpop.xlane.xlu0 %769
      %v771 = vsel %vm689, %v684, 0.0
      %772 = vadd.xlane.f32.xlu0 %v771
      %v773 = vpop.xlane.xlu0 %772
      %v774 = vsel %vm689, %v685, 0.0
      %775 = vadd.xlane.f32.xlu0 %v774
      %v776 = vpop.xlane.xlu0 %775
      %v777 = vsel %vm689, %v686, 0.0
      %778 = vadd.xlane.f32.xlu0 %v777
      %v779 = vpop.xlane.xlu0 %778
      %v780 = vsel %vm689, %v687, 0.0
      %781 = vadd.xlane.f32.xlu0 %v780
      %v782 = vpop.xlane.xlu0 %781
      %v783 = vsel %vm689, %v688, 0.0
      %784 = vadd.xlane.f32.xlu0 %v783
      %v785 = vpop.xlane.xlu0 %784
      %v786 = vxor.u32 %v692, 2147483648
      %v787 = vxor.u32 %v695, 2147483648
      %v788 = vxor.u32 %v698, 2147483648
      %v789 = vxor.u32 %v701, 2147483648
      %v790 = vxor.u32 %v704, 2147483648
      %v791 = vxor.u32 %v707, 2147483648
      %v792 = vxor.u32 %v710, 2147483648
      %v793 = vxor.u32 %v713, 2147483648
      %v794 = vxor.u32 %v716, 2147483648
      %v795 = vxor.u32 %v719, 2147483648
      %v796 = vxor.u32 %v722, 2147483648
      %v797 = vxor.u32 %v725, 2147483648
      %v798 = vxor.u32 %v728, 2147483648
      %v799 = vxor.u32 %v731, 2147483648
      %v800 = vxor.u32 %v734, 2147483648
      %v801 = vxor.u32 %v737, 2147483648
      %v802 = vxor.u32 %v740, 2147483648
      %v803 = vxor.u32 %v743, 2147483648
      %v804 = vxor.u32 %v746, 2147483648
      %v805 = vxor.u32 %v749, 2147483648
      %v806 = vxor.u32 %v752, 2147483648
      %v807 = vxor.u32 %v755, 2147483648
      %v808 = vxor.u32 %v758, 2147483648
      %v809 = vxor.u32 %v761, 2147483648
      %v810 = vxor.u32 %v764, 2147483648
      %v811 = vxor.u32 %v767, 2147483648
      %v812 = vxor.u32 %v770, 2147483648
      %v813 = vxor.u32 %v773, 2147483648
      %v814 = vxor.u32 %v776, 2147483648
      %v815 = vxor.u32 %v779, 2147483648
      %v816 = vxor.u32 %v782, 2147483648
      %v817 = vxor.u32 %v785, 2147483648
      %v818 = vmul.f32 %v786, 1.442695
      %v819 = vpow.pop %v818
      %v820 = vmul.f32 %v787, 1.442695
      %v821 = vpow.pop %v820
      %v822 = vmul.f32 %v788, 1.442695
      %v823 = vpow.pop %v822
      %v824 = vmul.f32 %v789, 1.442695
      %v825 = vpow.pop %v824
      %v826 = vmul.f32 %v790, 1.442695
      %v827 = vpow.pop %v826
      %v828 = vmul.f32 %v791, 1.442695
      %v829 = vpow.pop %v828
      %v830 = vmul.f32 %v792, 1.442695
      %v831 = vpow.pop %v830
      %v832 = vmul.f32 %v793, 1.442695
      %v833 = vpow.pop %v832
      %v834 = vmul.f32 %v794, 1.442695
      %v835 = vpow.pop %v834
      %v836 = vmul.f32 %v795, 1.442695
      %v837 = vpow.pop %v836
      %v838 = vmul.f32 %v796, 1.442695
      %v839 = vpow.pop %v838
      %v840 = vmul.f32 %v797, 1.442695
      %v841 = vpow.pop %v840
      %v842 = vmul.f32 %v798, 1.442695
      %v843 = vpow.pop %v842
      %v844 = vmul.f32 %v799, 1.442695
      %v845 = vpow.pop %v844
      %v846 = vmul.f32 %v800, 1.442695
      %v847 = vpow.pop %v846
      %v848 = vmul.f32 %v801, 1.442695
      %v849 = vpow.pop %v848
      %v850 = vmul.f32 %v802, 1.442695
      %v851 = vpow.pop %v850
      %v852 = vmul.f32 %v803, 1.442695
      %v853 = vpow.pop %v852
      %v854 = vmul.f32 %v804, 1.442695
      %v855 = vpow.pop %v854
      %v856 = vmul.f32 %v805, 1.442695
      %v857 = vpow.pop %v856
      %v858 = vmul.f32 %v806, 1.442695
      %v859 = vpow.pop %v858
      %v860 = vmul.f32 %v807, 1.442695
      %v861 = vpow.pop %v860
      %v862 = vmul.f32 %v808, 1.442695
      %v863 = vpow.pop %v862
      %v864 = vmul.f32 %v809, 1.442695
      %v865 = vpow.pop %v864
      %v866 = vmul.f32 %v810, 1.442695
      %v867 = vpow.pop %v866
      %v868 = vmul.f32 %v811, 1.442695
      %v869 = vpow.pop %v868
      %v870 = vmul.f32 %v812, 1.442695
      %v871 = vpow.pop %v870
      %v872 = vmul.f32 %v813, 1.442695
      %v873 = vpow.pop %v872
      %v874 = vmul.f32 %v814, 1.442695
      %v875 = vpow.pop %v874
      %v876 = vmul.f32 %v815, 1.442695
      %v877 = vpow.pop %v876
      %v878 = vmul.f32 %v816, 1.442695
      %v879 = vpow.pop %v878
      %v880 = vmul.f32 %v817, 1.442695
      %v881 = vpow.pop %v880
      %v882 = vadd.f32 %v819, 1.0
      %v883 = vadd.f32 %v821, 1.0
      %v884 = vadd.f32 %v823, 1.0
      %v885 = vadd.f32 %v825, 1.0
      %v886 = vadd.f32 %v827, 1.0
      %v887 = vadd.f32 %v829, 1.0
      %v888 = vadd.f32 %v831, 1.0
      %v889 = vadd.f32 %v833, 1.0
      %v890 = vadd.f32 %v835, 1.0
      %v891 = vadd.f32 %v837, 1.0
      %v892 = vadd.f32 %v839, 1.0
      %v893 = vadd.f32 %v841, 1.0
      %v894 = vadd.f32 %v843, 1.0
      %v895 = vadd.f32 %v845, 1.0
      %v896 = vadd.f32 %v847, 1.0
      %v897 = vadd.f32 %v849, 1.0
      %v898 = vadd.f32 %v851, 1.0
      %v899 = vadd.f32 %v853, 1.0
      %v900 = vadd.f32 %v855, 1.0
      %v901 = vadd.f32 %v857, 1.0
      %v902 = vadd.f32 %v859, 1.0
      %v903 = vadd.f32 %v861, 1.0
      %v904 = vadd.f32 %v863, 1.0
      %v905 = vadd.f32 %v865, 1.0
      %v906 = vadd.f32 %v867, 1.0
      %v907 = vadd.f32 %v869, 1.0
      %v908 = vadd.f32 %v871, 1.0
      %v909 = vadd.f32 %v873, 1.0
      %v910 = vadd.f32 %v875, 1.0
      %v911 = vadd.f32 %v877, 1.0
      %v912 = vadd.f32 %v879, 1.0
      %v913 = vadd.f32 %v881, 1.0
      %v914 = vrcp.pop %v882
      %v915 = vmul.f32 %v882, %v914
      %v916 = vsub.f32 1.0, %v915
      %v917 = vmul.f32 %v914, %v916
      %v918 = vadd.f32 %v914, %v917
      %vm919 = vweird.f32 %v882
      %vm920 = vweird.f32 %v914
      %vm921 = vmor %vm919, %vm920
      %v922 = vsel %vm921, %v914, %v918
      %v923 = vand.u32 2147483647, %v882
      %vm924 = vcmp.eq.f32.partialorder %v923, 8.507059e+37
      %v925 = vand.u32 %v882, 2147483648
      %v926 = vor.u32 1.1754944e-38, %v925
      %v927 = vsel %vm924, %v926, %v922
      %v928 = vmul.f32 1.0, %v927
      %v929 = vrcp.pop %v883
      %v930 = vmul.f32 %v883, %v929
      %v931 = vsub.f32 1.0, %v930
      %v932 = vmul.f32 %v929, %v931
      %v933 = vadd.f32 %v929, %v932
      %vm934 = vweird.f32 %v883
      %vm935 = vweird.f32 %v929
      %vm936 = vmor %vm934, %vm935
      %v937 = vsel %vm936, %v929, %v933
      %v938 = vand.u32 2147483647, %v883
      %vm939 = vcmp.eq.f32.partialorder %v938, 8.507059e+37
      %v940 = vand.u32 %v883, 2147483648
      %v941 = vor.u32 1.1754944e-38, %v940
      %v942 = vsel %vm939, %v941, %v937
      %v943 = vmul.f32 1.0, %v942
      %v944 = vrcp.pop %v884
      %v945 = vmul.f32 %v884, %v944
      %v946 = vsub.f32 1.0, %v945
      %v947 = vmul.f32 %v944, %v946
      %v948 = vadd.f32 %v944, %v947
      %vm949 = vweird.f32 %v884
      %vm950 = vweird.f32 %v944
      %vm951 = vmor %vm949, %vm950
      %v952 = vsel %vm951, %v944, %v948
      %v953 = vand.u32 2147483647, %v884
      %vm954 = vcmp.eq.f32.partialorder %v953, 8.507059e+37
      %v955 = vand.u32 %v884, 2147483648
      %v956 = vor.u32 1.1754944e-38, %v955
      %v957 = vsel %vm954, %v956, %v952
      %v958 = vmul.f32 1.0, %v957
      %v959 = vrcp.pop %v885
      %v960 = vmul.f32 %v885, %v959
      %v961 = vsub.f32 1.0, %v960
      %v962 = vmul.f32 %v959, %v961
      %v963 = vadd.f32 %v959, %v962
      %vm964 = vweird.f32 %v885
      %vm965 = vweird.f32 %v959
      %vm966 = vmor %vm964, %vm965
      %v967 = vsel %vm966, %v959, %v963
      %v968 = vand.u32 2147483647, %v885
      %vm969 = vcmp.eq.f32.partialorder %v968, 8.507059e+37
      %v970 = vand.u32 %v885, 2147483648
      %v971 = vor.u32 1.1754944e-38, %v970
      %v972 = vsel %vm969, %v971, %v967
      %v973 = vmul.f32 1.0, %v972
      %v974 = vrcp.pop %v886
      %v975 = vmul.f32 %v886, %v974
      %v976 = vsub.f32 1.0, %v975
      %v977 = vmul.f32 %v974, %v976
      %v978 = vadd.f32 %v974, %v977
      %vm979 = vweird.f32 %v886
      %vm980 = vweird.f32 %v974
      %vm981 = vmor %vm979, %vm980
      %v982 = vsel %vm981, %v974, %v978
      %v983 = vand.u32 2147483647, %v886
      %vm984 = vcmp.eq.f32.partialorder %v983, 8.507059e+37
      %v985 = vand.u32 %v886, 2147483648
      %v986 = vor.u32 1.1754944e-38, %v985
      %v987 = vsel %vm984, %v986, %v982
      %v988 = vmul.f32 1.0, %v987
      %v989 = vrcp.pop %v887
      %v990 = vmul.f32 %v887, %v989
      %v991 = vsub.f32 1.0, %v990
      %v992 = vmul.f32 %v989, %v991
      %v993 = vadd.f32 %v989, %v992
      %vm994 = vweird.f32 %v887
      %vm995 = vweird.f32 %v989
      %vm996 = vmor %vm994, %vm995
      %v997 = vsel %vm996, %v989, %v993
      %v998 = vand.u32 2147483647, %v887
      %vm999 = vcmp.eq.f32.partialorder %v998, 8.507059e+37
      %v1000 = vand.u32 %v887, 2147483648
      %v1001 = vor.u32 1.1754944e-38, %v1000
      %v1002 = vsel %vm999, %v1001, %v997
      %v1003 = vmul.f32 1.0, %v1002
      %v1004 = vrcp.pop %v888
      %v1005 = vmul.f32 %v888, %v1004
      %v1006 = vsub.f32 1.0, %v1005
      %v1007 = vmul.f32 %v1004, %v1006
      %v1008 = vadd.f32 %v1004, %v1007
      %vm1009 = vweird.f32 %v888
      %vm1010 = vweird.f32 %v1004
      %vm1011 = vmor %vm1009, %vm1010
      %v1012 = vsel %vm1011, %v1004, %v1008
      %v1013 = vand.u32 2147483647, %v888
      %vm1014 = vcmp.eq.f32.partialorder %v1013, 8.507059e+37
      %v1015 = vand.u32 %v888, 2147483648
      %v1016 = vor.u32 1.1754944e-38, %v1015
      %v1017 = vsel %vm1014, %v1016, %v1012
      %v1018 = vmul.f32 1.0, %v1017
      %v1019 = vrcp.pop %v889
      %v1020 = vmul.f32 %v889, %v1019
      %v1021 = vsub.f32 1.0, %v1020
      %v1022 = vmul.f32 %v1019, %v1021
      %v1023 = vadd.f32 %v1019, %v1022
      %vm1024 = vweird.f32 %v889
      %vm1025 = vweird.f32 %v1019
      %vm1026 = vmor %vm1024, %vm1025
      %v1027 = vsel %vm1026, %v1019, %v1023
      %v1028 = vand.u32 2147483647, %v889
      %vm1029 = vcmp.eq.f32.partialorder %v1028, 8.507059e+37
      %v1030 = vand.u32 %v889, 2147483648
      %v1031 = vor.u32 1.1754944e-38, %v1030
      %v1032 = vsel %vm1029, %v1031, %v1027
      %v1033 = vmul.f32 1.0, %v1032
      %v1034 = vrcp.pop %v890
      %v1035 = vmul.f32 %v890, %v1034
      %v1036 = vsub.f32 1.0, %v1035
      %v1037 = vmul.f32 %v1034, %v1036
      %v1038 = vadd.f32 %v1034, %v1037
      %vm1039 = vweird.f32 %v890
      %vm1040 = vweird.f32 %v1034
      %vm1041 = vmor %vm1039, %vm1040
      %v1042 = vsel %vm1041, %v1034, %v1038
      %v1043 = vand.u32 2147483647, %v890
      %vm1044 = vcmp.eq.f32.partialorder %v1043, 8.507059e+37
      %v1045 = vand.u32 %v890, 2147483648
      %v1046 = vor.u32 1.1754944e-38, %v1045
      %v1047 = vsel %vm1044, %v1046, %v1042
      %v1048 = vmul.f32 1.0, %v1047
      %v1049 = vrcp.pop %v891
      %v1050 = vmul.f32 %v891, %v1049
      %v1051 = vsub.f32 1.0, %v1050
      %v1052 = vmul.f32 %v1049, %v1051
      %v1053 = vadd.f32 %v1049, %v1052
      %vm1054 = vweird.f32 %v891
      %vm1055 = vweird.f32 %v1049
      %vm1056 = vmor %vm1054, %vm1055
      %v1057 = vsel %vm1056, %v1049, %v1053
      %v1058 = vand.u32 2147483647, %v891
      %vm1059 = vcmp.eq.f32.partialorder %v1058, 8.507059e+37
      %v1060 = vand.u32 %v891, 2147483648
      %v1061 = vor.u32 1.1754944e-38, %v1060
      %v1062 = vsel %vm1059, %v1061, %v1057
      %v1063 = vmul.f32 1.0, %v1062
      %v1064 = vrcp.pop %v892
      %v1065 = vmul.f32 %v892, %v1064
      %v1066 = vsub.f32 1.0, %v1065
      %v1067 = vmul.f32 %v1064, %v1066
      %v1068 = vadd.f32 %v1064, %v1067
      %vm1069 = vweird.f32 %v892
      %vm1070 = vweird.f32 %v1064
      %vm1071 = vmor %vm1069, %vm1070
      %v1072 = vsel %vm1071, %v1064, %v1068
      %v1073 = vand.u32 2147483647, %v892
      %vm1074 = vcmp.eq.f32.partialorder %v1073, 8.507059e+37
      %v1075 = vand.u32 %v892, 2147483648
      %v1076 = vor.u32 1.1754944e-38, %v1075
      %v1077 = vsel %vm1074, %v1076, %v1072
      %v1078 = vmul.f32 1.0, %v1077
      %v1079 = vrcp.pop %v893
      %v1080 = vmul.f32 %v893, %v1079
      %v1081 = vsub.f32 1.0, %v1080
      %v1082 = vmul.f32 %v1079, %v1081
      %v1083 = vadd.f32 %v1079, %v1082
      %vm1084 = vweird.f32 %v893
      %vm1085 = vweird.f32 %v1079
      %vm1086 = vmor %vm1084, %vm1085
      %v1087 = vsel %vm1086, %v1079, %v1083
      %v1088 = vand.u32 2147483647, %v893
      %vm1089 = vcmp.eq.f32.partialorder %v1088, 8.507059e+37
      %v1090 = vand.u32 %v893, 2147483648
      %v1091 = vor.u32 1.1754944e-38, %v1090
      %v1092 = vsel %vm1089, %v1091, %v1087
      %v1093 = vmul.f32 1.0, %v1092
      %v1094 = vrcp.pop %v894
      %v1095 = vmul.f32 %v894, %v1094
      %v1096 = vsub.f32 1.0, %v1095
      %v1097 = vmul.f32 %v1094, %v1096
      %v1098 = vadd.f32 %v1094, %v1097
      %vm1099 = vweird.f32 %v894
      %vm1100 = vweird.f32 %v1094
      %vm1101 = vmor %vm1099, %vm1100
      %v1102 = vsel %vm1101, %v1094, %v1098
      %v1103 = vand.u32 2147483647, %v894
      %vm1104 = vcmp.eq.f32.partialorder %v1103, 8.507059e+37
      %v1105 = vand.u32 %v894, 2147483648
      %v1106 = vor.u32 1.1754944e-38, %v1105
      %v1107 = vsel %vm1104, %v1106, %v1102
      %v1108 = vmul.f32 1.0, %v1107
      %v1109 = vrcp.pop %v895
      %v1110 = vmul.f32 %v895, %v1109
      %v1111 = vsub.f32 1.0, %v1110
      %v1112 = vmul.f32 %v1109, %v1111
      %v1113 = vadd.f32 %v1109, %v1112
      %vm1114 = vweird.f32 %v895
      %vm1115 = vweird.f32 %v1109
      %vm1116 = vmor %vm1114, %vm1115
      %v1117 = vsel %vm1116, %v1109, %v1113
      %v1118 = vand.u32 2147483647, %v895
      %vm1119 = vcmp.eq.f32.partialorder %v1118, 8.507059e+37
      %v1120 = vand.u32 %v895, 2147483648
      %v1121 = vor.u32 1.1754944e-38, %v1120
      %v1122 = vsel %vm1119, %v1121, %v1117
      %v1123 = vmul.f32 1.0, %v1122
      %v1124 = vrcp.pop %v896
      %v1125 = vmul.f32 %v896, %v1124
      %v1126 = vsub.f32 1.0, %v1125
      %v1127 = vmul.f32 %v1124, %v1126
      %v1128 = vadd.f32 %v1124, %v1127
      %vm1129 = vweird.f32 %v896
      %vm1130 = vweird.f32 %v1124
      %vm1131 = vmor %vm1129, %vm1130
      %v1132 = vsel %vm1131, %v1124, %v1128
      %v1133 = vand.u32 2147483647, %v896
      %vm1134 = vcmp.eq.f32.partialorder %v1133, 8.507059e+37
      %v1135 = vand.u32 %v896, 2147483648
      %v1136 = vor.u32 1.1754944e-38, %v1135
      %v1137 = vsel %vm1134, %v1136, %v1132
      %v1138 = vmul.f32 1.0, %v1137
      %v1139 = vrcp.pop %v897
      %v1140 = vmul.f32 %v897, %v1139
      %v1141 = vsub.f32 1.0, %v1140
      %v1142 = vmul.f32 %v1139, %v1141
      %v1143 = vadd.f32 %v1139, %v1142
      %vm1144 = vweird.f32 %v897
      %vm1145 = vweird.f32 %v1139
      %vm1146 = vmor %vm1144, %vm1145
      %v1147 = vsel %vm1146, %v1139, %v1143
      %v1148 = vand.u32 2147483647, %v897
      %vm1149 = vcmp.eq.f32.partialorder %v1148, 8.507059e+37
      %v1150 = vand.u32 %v897, 2147483648
      %v1151 = vor.u32 1.1754944e-38, %v1150
      %v1152 = vsel %vm1149, %v1151, %v1147
      %v1153 = vmul.f32 1.0, %v1152
      %v1154 = vrcp.pop %v898
      %v1155 = vmul.f32 %v898, %v1154
      %v1156 = vsub.f32 1.0, %v1155
      %v1157 = vmul.f32 %v1154, %v1156
      %v1158 = vadd.f32 %v1154, %v1157
      %vm1159 = vweird.f32 %v898
      %vm1160 = vweird.f32 %v1154
      %vm1161 = vmor %vm1159, %vm1160
      %v1162 = vsel %vm1161, %v1154, %v1158
      %v1163 = vand.u32 2147483647, %v898
      %vm1164 = vcmp.eq.f32.partialorder %v1163, 8.507059e+37
      %v1165 = vand.u32 %v898, 2147483648
      %v1166 = vor.u32 1.1754944e-38, %v1165
      %v1167 = vsel %vm1164, %v1166, %v1162
      %v1168 = vmul.f32 1.0, %v1167
      %v1169 = vrcp.pop %v899
      %v1170 = vmul.f32 %v899, %v1169
      %v1171 = vsub.f32 1.0, %v1170
      %v1172 = vmul.f32 %v1169, %v1171
      %v1173 = vadd.f32 %v1169, %v1172
      %vm1174 = vweird.f32 %v899
      %vm1175 = vweird.f32 %v1169
      %vm1176 = vmor %vm1174, %vm1175
      %v1177 = vsel %vm1176, %v1169, %v1173
      %v1178 = vand.u32 2147483647, %v899
      %vm1179 = vcmp.eq.f32.partialorder %v1178, 8.507059e+37
      %v1180 = vand.u32 %v899, 2147483648
      %v1181 = vor.u32 1.1754944e-38, %v1180
      %v1182 = vsel %vm1179, %v1181, %v1177
      %v1183 = vmul.f32 1.0, %v1182
      %v1184 = vrcp.pop %v900
      %v1185 = vmul.f32 %v900, %v1184
      %v1186 = vsub.f32 1.0, %v1185
      %v1187 = vmul.f32 %v1184, %v1186
      %v1188 = vadd.f32 %v1184, %v1187
      %vm1189 = vweird.f32 %v900
      %vm1190 = vweird.f32 %v1184
      %vm1191 = vmor %vm1189, %vm1190
      %v1192 = vsel %vm1191, %v1184, %v1188
      %v1193 = vand.u32 2147483647, %v900
      %vm1194 = vcmp.eq.f32.partialorder %v1193, 8.507059e+37
      %v1195 = vand.u32 %v900, 2147483648
      %v1196 = vor.u32 1.1754944e-38, %v1195
      %v1197 = vsel %vm1194, %v1196, %v1192
      %v1198 = vmul.f32 1.0, %v1197
      %v1199 = vrcp.pop %v901
      %v1200 = vmul.f32 %v901, %v1199
      %v1201 = vsub.f32 1.0, %v1200
      %v1202 = vmul.f32 %v1199, %v1201
      %v1203 = vadd.f32 %v1199, %v1202
      %vm1204 = vweird.f32 %v901
      %vm1205 = vweird.f32 %v1199
      %vm1206 = vmor %vm1204, %vm1205
      %v1207 = vsel %vm1206, %v1199, %v1203
      %v1208 = vand.u32 2147483647, %v901
      %vm1209 = vcmp.eq.f32.partialorder %v1208, 8.507059e+37
      %v1210 = vand.u32 %v901, 2147483648
      %v1211 = vor.u32 1.1754944e-38, %v1210
      %v1212 = vsel %vm1209, %v1211, %v1207
      %v1213 = vmul.f32 1.0, %v1212
      %v1214 = vrcp.pop %v902
      %v1215 = vmul.f32 %v902, %v1214
      %v1216 = vsub.f32 1.0, %v1215
      %v1217 = vmul.f32 %v1214, %v1216
      %v1218 = vadd.f32 %v1214, %v1217
      %vm1219 = vweird.f32 %v902
      %vm1220 = vweird.f32 %v1214
      %vm1221 = vmor %vm1219, %vm1220
      %v1222 = vsel %vm1221, %v1214, %v1218
      %v1223 = vand.u32 2147483647, %v902
      %vm1224 = vcmp.eq.f32.partialorder %v1223, 8.507059e+37
      %v1225 = vand.u32 %v902, 2147483648
      %v1226 = vor.u32 1.1754944e-38, %v1225
      %v1227 = vsel %vm1224, %v1226, %v1222
      %v1228 = vmul.f32 1.0, %v1227
      %v1229 = vrcp.pop %v903
      %v1230 = vmul.f32 %v903, %v1229
      %v1231 = vsub.f32 1.0, %v1230
      %v1232 = vmul.f32 %v1229, %v1231
      %v1233 = vadd.f32 %v1229, %v1232
      %vm1234 = vweird.f32 %v903
      %vm1235 = vweird.f32 %v1229
      %vm1236 = vmor %vm1234, %vm1235
      %v1237 = vsel %vm1236, %v1229, %v1233
      %v1238 = vand.u32 2147483647, %v903
      %vm1239 = vcmp.eq.f32.partialorder %v1238, 8.507059e+37
      %v1240 = vand.u32 %v903, 2147483648
      %v1241 = vor.u32 1.1754944e-38, %v1240
      %v1242 = vsel %vm1239, %v1241, %v1237
      %v1243 = vmul.f32 1.0, %v1242
      %v1244 = vrcp.pop %v904
      %v1245 = vmul.f32 %v904, %v1244
      %v1246 = vsub.f32 1.0, %v1245
      %v1247 = vmul.f32 %v1244, %v1246
      %v1248 = vadd.f32 %v1244, %v1247
      %vm1249 = vweird.f32 %v904
      %vm1250 = vweird.f32 %v1244
      %vm1251 = vmor %vm1249, %vm1250
      %v1252 = vsel %vm1251, %v1244, %v1248
      %v1253 = vand.u32 2147483647, %v904
      %vm1254 = vcmp.eq.f32.partialorder %v1253, 8.507059e+37
      %v1255 = vand.u32 %v904, 2147483648
      %v1256 = vor.u32 1.1754944e-38, %v1255
      %v1257 = vsel %vm1254, %v1256, %v1252
      %v1258 = vmul.f32 1.0, %v1257
      %v1259 = vrcp.pop %v905
      %v1260 = vmul.f32 %v905, %v1259
      %v1261 = vsub.f32 1.0, %v1260
      %v1262 = vmul.f32 %v1259, %v1261
      %v1263 = vadd.f32 %v1259, %v1262
      %vm1264 = vweird.f32 %v905
      %vm1265 = vweird.f32 %v1259
      %vm1266 = vmor %vm1264, %vm1265
      %v1267 = vsel %vm1266, %v1259, %v1263
      %v1268 = vand.u32 2147483647, %v905
      %vm1269 = vcmp.eq.f32.partialorder %v1268, 8.507059e+37
      %v1270 = vand.u32 %v905, 2147483648
      %v1271 = vor.u32 1.1754944e-38, %v1270
      %v1272 = vsel %vm1269, %v1271, %v1267
      %v1273 = vmul.f32 1.0, %v1272
      %v1274 = vrcp.pop %v906
      %v1275 = vmul.f32 %v906, %v1274
      %v1276 = vsub.f32 1.0, %v1275
      %v1277 = vmul.f32 %v1274, %v1276
      %v1278 = vadd.f32 %v1274, %v1277
      %vm1279 = vweird.f32 %v906
      %vm1280 = vweird.f32 %v1274
      %vm1281 = vmor %vm1279, %vm1280
      %v1282 = vsel %vm1281, %v1274, %v1278
      %v1283 = vand.u32 2147483647, %v906
      %vm1284 = vcmp.eq.f32.partialorder %v1283, 8.507059e+37
      %v1285 = vand.u32 %v906, 2147483648
      %v1286 = vor.u32 1.1754944e-38, %v1285
      %v1287 = vsel %vm1284, %v1286, %v1282
      %v1288 = vmul.f32 1.0, %v1287
      %v1289 = vrcp.pop %v907
      %v1290 = vmul.f32 %v907, %v1289
      %v1291 = vsub.f32 1.0, %v1290
      %v1292 = vmul.f32 %v1289, %v1291
      %v1293 = vadd.f32 %v1289, %v1292
      %vm1294 = vweird.f32 %v907
      %vm1295 = vweird.f32 %v1289
      %vm1296 = vmor %vm1294, %vm1295
      %v1297 = vsel %vm1296, %v1289, %v1293
      %v1298 = vand.u32 2147483647, %v907
      %vm1299 = vcmp.eq.f32.partialorder %v1298, 8.507059e+37
      %v1300 = vand.u32 %v907, 2147483648
      %v1301 = vor.u32 1.1754944e-38, %v1300
      %v1302 = vsel %vm1299, %v1301, %v1297
      %v1303 = vmul.f32 1.0, %v1302
      %v1304 = vrcp.pop %v908
      %v1305 = vmul.f32 %v908, %v1304
      %v1306 = vsub.f32 1.0, %v1305
      %v1307 = vmul.f32 %v1304, %v1306
      %v1308 = vadd.f32 %v1304, %v1307
      %vm1309 = vweird.f32 %v908
      %vm1310 = vweird.f32 %v1304
      %vm1311 = vmor %vm1309, %vm1310
      %v1312 = vsel %vm1311, %v1304, %v1308
      %v1313 = vand.u32 2147483647, %v908
      %vm1314 = vcmp.eq.f32.partialorder %v1313, 8.507059e+37
      %v1315 = vand.u32 %v908, 2147483648
      %v1316 = vor.u32 1.1754944e-38, %v1315
      %v1317 = vsel %vm1314, %v1316, %v1312
      %v1318 = vmul.f32 1.0, %v1317
      %v1319 = vrcp.pop %v909
      %v1320 = vmul.f32 %v909, %v1319
      %v1321 = vsub.f32 1.0, %v1320
      %v1322 = vmul.f32 %v1319, %v1321
      %v1323 = vadd.f32 %v1319, %v1322
      %vm1324 = vweird.f32 %v909
      %vm1325 = vweird.f32 %v1319
      %vm1326 = vmor %vm1324, %vm1325
      %v1327 = vsel %vm1326, %v1319, %v1323
      %v1328 = vand.u32 2147483647, %v909
      %vm1329 = vcmp.eq.f32.partialorder %v1328, 8.507059e+37
      %v1330 = vand.u32 %v909, 2147483648
      %v1331 = vor.u32 1.1754944e-38, %v1330
      %v1332 = vsel %vm1329, %v1331, %v1327
      %v1333 = vmul.f32 1.0, %v1332
      %v1334 = vrcp.pop %v910
      %v1335 = vmul.f32 %v910, %v1334
      %v1336 = vsub.f32 1.0, %v1335
      %v1337 = vmul.f32 %v1334, %v1336
      %v1338 = vadd.f32 %v1334, %v1337
      %vm1339 = vweird.f32 %v910
      %vm1340 = vweird.f32 %v1334
      %vm1341 = vmor %vm1339, %vm1340
      %v1342 = vsel %vm1341, %v1334, %v1338
      %v1343 = vand.u32 2147483647, %v910
      %vm1344 = vcmp.eq.f32.partialorder %v1343, 8.507059e+37
      %v1345 = vand.u32 %v910, 2147483648
      %v1346 = vor.u32 1.1754944e-38, %v1345
      %v1347 = vsel %vm1344, %v1346, %v1342
      %v1348 = vmul.f32 1.0, %v1347
      %v1349 = vrcp.pop %v911
      %v1350 = vmul.f32 %v911, %v1349
      %v1351 = vsub.f32 1.0, %v1350
      %v1352 = vmul.f32 %v1349, %v1351
      %v1353 = vadd.f32 %v1349, %v1352
      %vm1354 = vweird.f32 %v911
      %vm1355 = vweird.f32 %v1349
      %vm1356 = vmor %vm1354, %vm1355
      %v1357 = vsel %vm1356, %v1349, %v1353
      %v1358 = vand.u32 2147483647, %v911
      %vm1359 = vcmp.eq.f32.partialorder %v1358, 8.507059e+37
      %v1360 = vand.u32 %v911, 2147483648
      %v1361 = vor.u32 1.1754944e-38, %v1360
      %v1362 = vsel %vm1359, %v1361, %v1357
      %v1363 = vmul.f32 1.0, %v1362
      %v1364 = vrcp.pop %v912
      %v1365 = vmul.f32 %v912, %v1364
      %v1366 = vsub.f32 1.0, %v1365
      %v1367 = vmul.f32 %v1364, %v1366
      %v1368 = vadd.f32 %v1364, %v1367
      %vm1369 = vweird.f32 %v912
      %vm1370 = vweird.f32 %v1364
      %vm1371 = vmor %vm1369, %vm1370
      %v1372 = vsel %vm1371, %v1364, %v1368
      %v1373 = vand.u32 2147483647, %v912
      %vm1374 = vcmp.eq.f32.partialorder %v1373, 8.507059e+37
      %v1375 = vand.u32 %v912, 2147483648
      %v1376 = vor.u32 1.1754944e-38, %v1375
      %v1377 = vsel %vm1374, %v1376, %v1372
      %v1378 = vmul.f32 1.0, %v1377
      %v1379 = vrcp.pop %v913
      %v1380 = vmul.f32 %v913, %v1379
      %v1381 = vsub.f32 1.0, %v1380
      %v1382 = vmul.f32 %v1379, %v1381
      %v1383 = vadd.f32 %v1379, %v1382
      %vm1384 = vweird.f32 %v913
      %vm1385 = vweird.f32 %v1379
      %vm1386 = vmor %vm1384, %vm1385
      %v1387 = vsel %vm1386, %v1379, %v1383
      %v1388 = vand.u32 2147483647, %v913
      %vm1389 = vcmp.eq.f32.partialorder %v1388, 8.507059e+37
      %v1390 = vand.u32 %v913, 2147483648
      %v1391 = vor.u32 1.1754944e-38, %v1390
      %v1392 = vsel %vm1389, %v1391, %v1387
      %v1393 = vmul.f32 1.0, %v1392
      %v1396 = vperm.slane %v275, 0
      %v1397 = vlaneseq
      %v1398 = vshrl.u32 %v1397, 7
      %1400 = vset.pattern.permute.xlu0 %v1398
      %1401 = vperm.xlu0 %1400, %v1396
      %v1402 = vpop.permute.xlu0 %1401
      %v1403 = vlaneseq
      %v1404 = vshrl.u32 %v1403, 7
      %v1405 = vadd.s32 %v1404, 8
      %1406 = vset.pattern.permute.xlu0 %v1405
      %1407 = vperm.xlu0 %1406, %v1396
      %v1408 = vpop.permute.xlu0 %1407
      %v1409 = vperm.slane %v275, 1
      %v1410 = vlaneseq
      %v1411 = vshrl.u32 %v1410, 7
      %1413 = vset.pattern.permute.xlu0 %v1411
      %1414 = vperm.xlu0 %1413, %v1409
      %v1415 = vpop.permute.xlu0 %1414
      %v1416 = vlaneseq
      %v1417 = vshrl.u32 %v1416, 7
      %v1418 = vadd.s32 %v1417, 8
      %1419 = vset.pattern.permute.xlu0 %v1418
      %1420 = vperm.xlu0 %1419, %v1409
      %v1421 = vpop.permute.xlu0 %1420
      %v1422 = vperm.slane %v275, 2
      %v1423 = vlaneseq
      %v1424 = vshrl.u32 %v1423, 7
      %1426 = vset.pattern.permute.xlu0 %v1424
      %1427 = vperm.xlu0 %1426, %v1422
      %v1428 = vpop.permute.xlu0 %1427
      %v1429 = vlaneseq
      %v1430 = vshrl.u32 %v1429, 7
      %v1431 = vadd.s32 %v1430, 8
      %1432 = vset.pattern.permute.xlu0 %v1431
      %1433 = vperm.xlu0 %1432, %v1422
      %v1434 = vpop.permute.xlu0 %1433
      %v1435 = vperm.slane %v275, 3
      %v1436 = vlaneseq
      %v1437 = vshrl.u32 %v1436, 7
      %1439 = vset.pattern.permute.xlu0 %v1437
      %1440 = vperm.xlu0 %1439, %v1435
      %v1441 = vpop.permute.xlu0 %1440
      %v1442 = vlaneseq
      %v1443 = vshrl.u32 %v1442, 7
      %v1444 = vadd.s32 %v1443, 8
      %1445 = vset.pattern.permute.xlu0 %v1444
      %1446 = vperm.xlu0 %1445, %v1435
      %v1447 = vpop.permute.xlu0 %1446
      %v1448 = vperm.slane %v275, 4
      %v1449 = vlaneseq
      %v1450 = vshrl.u32 %v1449, 7
      %1452 = vset.pattern.permute.xlu0 %v1450
      %1453 = vperm.xlu0 %1452, %v1448
      %v1454 = vpop.permute.xlu0 %1453
      %v1455 = vlaneseq
      %v1456 = vshrl.u32 %v1455, 7
      %v1457 = vadd.s32 %v1456, 8
      %1458 = vset.pattern.permute.xlu0 %v1457
      %1459 = vperm.xlu0 %1458, %v1448
      %v1460 = vpop.permute.xlu0 %1459
      %v1461 = vperm.slane %v275, 5
      %v1462 = vlaneseq
      %v1463 = vshrl.u32 %v1462, 7
      %1465 = vset.pattern.permute.xlu0 %v1463
      %1466 = vperm.xlu0 %1465, %v1461
      %v1467 = vpop.permute.xlu0 %1466
      %v1468 = vlaneseq
      %v1469 = vshrl.u32 %v1468, 7
      %v1470 = vadd.s32 %v1469, 8
      %1471 = vset.pattern.permute.xlu0 %v1470
      %1472 = vperm.xlu0 %1471, %v1461
      %v1473 = vpop.permute.xlu0 %1472
      %v1474 = vperm.slane %v275, 6
      %v1475 = vlaneseq
      %v1476 = vshrl.u32 %v1475, 7
      %1478 = vset.pattern.permute.xlu0 %v1476
      %1479 = vperm.xlu0 %1478, %v1474
      %v1480 = vpop.permute.xlu0 %1479
      %v1481 = vlaneseq
      %v1482 = vshrl.u32 %v1481, 7
      %v1483 = vadd.s32 %v1482, 8
      %1484 = vset.pattern.permute.xlu0 %v1483
      %1485 = vperm.xlu0 %1484, %v1474
      %v1486 = vpop.permute.xlu0 %1485
      %v1487 = vperm.slane %v275, 7
      %v1488 = vlaneseq
      %v1489 = vshrl.u32 %v1488, 7
      %1491 = vset.pattern.permute.xlu0 %v1489
      %1492 = vperm.xlu0 %1491, %v1487
      %v1493 = vpop.permute.xlu0 %1492
      %v1494 = vlaneseq
      %v1495 = vshrl.u32 %v1494, 7
      %v1496 = vadd.s32 %v1495, 8
      %1497 = vset.pattern.permute.xlu0 %v1496
      %1498 = vperm.xlu0 %1497, %v1487
      %v1499 = vpop.permute.xlu0 %1498
      %v1500 = vperm.slane %v276, 0
      %v1501 = vlaneseq
      %v1502 = vshrl.u32 %v1501, 7
      %1504 = vset.pattern.permute.xlu0 %v1502
      %1505 = vperm.xlu0 %1504, %v1500
      %v1506 = vpop.permute.xlu0 %1505
      %v1507 = vlaneseq
      %v1508 = vshrl.u32 %v1507, 7
      %v1509 = vadd.s32 %v1508, 8
      %1510 = vset.pattern.permute.xlu0 %v1509
      %1511 = vperm.xlu0 %1510, %v1500
      %v1512 = vpop.permute.xlu0 %1511
      %v1513 = vperm.slane %v276, 1
      %v1514 = vlaneseq
      %v1515 = vshrl.u32 %v1514, 7
      %1517 = vset.pattern.permute.xlu0 %v1515
      %1518 = vperm.xlu0 %1517, %v1513
      %v1519 = vpop.permute.xlu0 %1518
      %v1520 = vlaneseq
      %v1521 = vshrl.u32 %v1520, 7
      %v1522 = vadd.s32 %v1521, 8
      %1523 = vset.pattern.permute.xlu0 %v1522
      %1524 = vperm.xlu0 %1523, %v1513
      %v1525 = vpop.permute.xlu0 %1524
      %v1526 = vperm.slane %v276, 2
      %v1527 = vlaneseq
      %v1528 = vshrl.u32 %v1527, 7
      %1530 = vset.pattern.permute.xlu0 %v1528
      %1531 = vperm.xlu0 %1530, %v1526
      %v1532 = vpop.permute.xlu0 %1531
      %v1533 = vlaneseq
      %v1534 = vshrl.u32 %v1533, 7
      %v1535 = vadd.s32 %v1534, 8
      %1536 = vset.pattern.permute.xlu0 %v1535
      %1537 = vperm.xlu0 %1536, %v1526
      %v1538 = vpop.permute.xlu0 %1537
      %v1539 = vperm.slane %v276, 3
      %v1540 = vlaneseq
      %v1541 = vshrl.u32 %v1540, 7
      %1543 = vset.pattern.permute.xlu0 %v1541
      %1544 = vperm.xlu0 %1543, %v1539
      %v1545 = vpop.permute.xlu0 %1544
      %v1546 = vlaneseq
      %v1547 = vshrl.u32 %v1546, 7
      %v1548 = vadd.s32 %v1547, 8
      %1549 = vset.pattern.permute.xlu0 %v1548
      %1550 = vperm.xlu0 %1549, %v1539
      %v1551 = vpop.permute.xlu0 %1550
      %v1552 = vperm.slane %v276, 4
      %v1553 = vlaneseq
      %v1554 = vshrl.u32 %v1553, 7
      %1556 = vset.pattern.permute.xlu0 %v1554
      %1557 = vperm.xlu0 %1556, %v1552
      %v1558 = vpop.permute.xlu0 %1557
      %v1559 = vlaneseq
      %v1560 = vshrl.u32 %v1559, 7
      %v1561 = vadd.s32 %v1560, 8
      %1562 = vset.pattern.permute.xlu0 %v1561
      %1563 = vperm.xlu0 %1562, %v1552
      %v1564 = vpop.permute.xlu0 %1563
      %v1565 = vperm.slane %v276, 5
      %v1566 = vlaneseq
      %v1567 = vshrl.u32 %v1566, 7
      %1569 = vset.pattern.permute.xlu0 %v1567
      %1570 = vperm.xlu0 %1569, %v1565
      %v1571 = vpop.permute.xlu0 %1570
      %v1572 = vlaneseq
      %v1573 = vshrl.u32 %v1572, 7
      %v1574 = vadd.s32 %v1573, 8
      %1575 = vset.pattern.permute.xlu0 %v1574
      %1576 = vperm.xlu0 %1575, %v1565
      %v1577 = vpop.permute.xlu0 %1576
      %v1578 = vperm.slane %v276, 6
      %v1579 = vlaneseq
      %v1580 = vshrl.u32 %v1579, 7
      %1582 = vset.pattern.permute.xlu0 %v1580
      %1583 = vperm.xlu0 %1582, %v1578
      %v1584 = vpop.permute.xlu0 %1583
      %v1585 = vlaneseq
      %v1586 = vshrl.u32 %v1585, 7
      %v1587 = vadd.s32 %v1586, 8
      %1588 = vset.pattern.permute.xlu0 %v1587
      %1589 = vperm.xlu0 %1588, %v1578
      %v1590 = vpop.permute.xlu0 %1589
      %v1591 = vperm.slane %v276, 7
      %v1592 = vlaneseq
      %v1593 = vshrl.u32 %v1592, 7
      %1595 = vset.pattern.permute.xlu0 %v1593
      %1596 = vperm.xlu0 %1595, %v1591
      %v1597 = vpop.permute.xlu0 %1596
      %v1598 = vlaneseq
      %v1599 = vshrl.u32 %v1598, 7
      %v1600 = vadd.s32 %v1599, 8
      %1601 = vset.pattern.permute.xlu0 %v1600
      %1602 = vperm.xlu0 %1601, %v1591
      %v1603 = vpop.permute.xlu0 %1602
      %v1636 = vmul.f32 %v928, %v1402
      %v1637 = vmul.f32 %v943, %v1408
      %v1638 = vmul.f32 %v958, %v1415
      %v1639 = vmul.f32 %v973, %v1421
      %v1640 = vmul.f32 %v988, %v1428
      %v1641 = vmul.f32 %v1003, %v1434
      %v1642 = vmul.f32 %v1018, %v1441
      %v1643 = vmul.f32 %v1033, %v1447
      %v1644 = vmul.f32 %v1048, %v1454
      %v1645 = vmul.f32 %v1063, %v1460
      %v1646 = vmul.f32 %v1078, %v1467
      %v1647 = vmul.f32 %v1093, %v1473
      %v1648 = vmul.f32 %v1108, %v1480
      %v1649 = vmul.f32 %v1123, %v1486
      %v1650 = vmul.f32 %v1138, %v1493
      %v1651 = vmul.f32 %v1153, %v1499
      %v1652 = vmul.f32 %v1168, %v1506
      %v1653 = vmul.f32 %v1183, %v1512
      %v1654 = vmul.f32 %v1198, %v1519
      %v1655 = vmul.f32 %v1213, %v1525
      %v1656 = vmul.f32 %v1228, %v1532
      %v1657 = vmul.f32 %v1243, %v1538
      %v1658 = vmul.f32 %v1258, %v1545
      %v1659 = vmul.f32 %v1273, %v1551
      %v1660 = vmul.f32 %v1288, %v1558
      %v1661 = vmul.f32 %v1303, %v1564
      %v1662 = vmul.f32 %v1318, %v1571
      %v1663 = vmul.f32 %v1333, %v1577
      %v1664 = vmul.f32 %v1348, %v1584
      %v1665 = vmul.f32 %v1363, %v1590
      %v1666 = vmul.f32 %v1378, %v1597
      %v1667 = vmul.f32 %v1393, %v1603
      %1700 = vset.pattern.permute.xlu0 0
      %1701 = vperm.xlu0 %1700, %v1636
      %v1702 = vpop.permute.xlu0 %1701
      %1703 = vset.pattern.permute.xlu0 0
      %1704 = vperm.xlu0 %1703, %v1637
      %v1705 = vpop.permute.xlu0 %1704
      %1706 = vset.pattern.permute.xlu0 0
      %1707 = vperm.xlu0 %1706, %v1638
      %v1708 = vpop.permute.xlu0 %1707
      %1709 = vset.pattern.permute.xlu0 0
      %1710 = vperm.xlu0 %1709, %v1639
      %v1711 = vpop.permute.xlu0 %1710
      %1712 = vset.pattern.permute.xlu0 0
      %1713 = vperm.xlu0 %1712, %v1640
      %v1714 = vpop.permute.xlu0 %1713
      %1715 = vset.pattern.permute.xlu0 0
      %1716 = vperm.xlu0 %1715, %v1641
      %v1717 = vpop.permute.xlu0 %1716
      %1718 = vset.pattern.permute.xlu0 0
      %1719 = vperm.xlu0 %1718, %v1642
      %v1720 = vpop.permute.xlu0 %1719
      %1721 = vset.pattern.permute.xlu0 0
      %1722 = vperm.xlu0 %1721, %v1643
      %v1723 = vpop.permute.xlu0 %1722
      %1724 = vset.pattern.permute.xlu0 0
      %1725 = vperm.xlu0 %1724, %v1644
      %v1726 = vpop.permute.xlu0 %1725
      %1727 = vset.pattern.permute.xlu0 0
      %1728 = vperm.xlu0 %1727, %v1645
      %v1729 = vpop.permute.xlu0 %1728
      %1730 = vset.pattern.permute.xlu0 0
      %1731 = vperm.xlu0 %1730, %v1646
      %v1732 = vpop.permute.xlu0 %1731
      %1733 = vset.pattern.permute.xlu0 0
      %1734 = vperm.xlu0 %1733, %v1647
      %v1735 = vpop.permute.xlu0 %1734
      %1736 = vset.pattern.permute.xlu0 0
      %1737 = vperm.xlu0 %1736, %v1648
      %v1738 = vpop.permute.xlu0 %1737
      %1739 = vset.pattern.permute.xlu0 0
      %1740 = vperm.xlu0 %1739, %v1649
      %v1741 = vpop.permute.xlu0 %1740
      %1742 = vset.pattern.permute.xlu0 0
      %1743 = vperm.xlu0 %1742, %v1650
      %v1744 = vpop.permute.xlu0 %1743
      %1745 = vset.pattern.permute.xlu0 0
      %1746 = vperm.xlu0 %1745, %v1651
      %v1747 = vpop.permute.xlu0 %1746
      %1748 = vset.pattern.permute.xlu0 0
      %1749 = vperm.xlu0 %1748, %v1652
      %v1750 = vpop.permute.xlu0 %1749
      %1751 = vset.pattern.permute.xlu0 0
      %1752 = vperm.xlu0 %1751, %v1653
      %v1753 = vpop.permute.xlu0 %1752
      %1754 = vset.pattern.permute.xlu0 0
      %1755 = vperm.xlu0 %1754, %v1654
      %v1756 = vpop.permute.xlu0 %1755
      %1757 = vset.pattern.permute.xlu0 0
      %1758 = vperm.xlu0 %1757, %v1655
      %v1759 = vpop.permute.xlu0 %1758
      %1760 = vset.pattern.permute.xlu0 0
      %1761 = vperm.xlu0 %1760, %v1656
      %v1762 = vpop.permute.xlu0 %1761
      %1763 = vset.pattern.permute.xlu0 0
      %1764 = vperm.xlu0 %1763, %v1657
      %v1765 = vpop.permute.xlu0 %1764
      %1766 = vset.pattern.permute.xlu0 0
      %1767 = vperm.xlu0 %1766, %v1658
      %v1768 = vpop.permute.xlu0 %1767
      %1769 = vset.pattern.permute.xlu0 0
      %1770 = vperm.xlu0 %1769, %v1659
      %v1771 = vpop.permute.xlu0 %1770
      %1772 = vset.pattern.permute.xlu0 0
      %1773 = vperm.xlu0 %1772, %v1660
      %v1774 = vpop.permute.xlu0 %1773
      %1775 = vset.pattern.permute.xlu0 0
      %1776 = vperm.xlu0 %1775, %v1661
      %v1777 = vpop.permute.xlu0 %1776
      %1778 = vset.pattern.permute.xlu0 0
      %1779 = vperm.xlu0 %1778, %v1662
      %v1780 = vpop.permute.xlu0 %1779
      %1781 = vset.pattern.permute.xlu0 0
      %1782 = vperm.xlu0 %1781, %v1663
      %v1783 = vpop.permute.xlu0 %1782
      %1784 = vset.pattern.permute.xlu0 0
      %1785 = vperm.xlu0 %1784, %v1664
      %v1786 = vpop.permute.xlu0 %1785
      %1787 = vset.pattern.permute.xlu0 0
      %1788 = vperm.xlu0 %1787, %v1665
      %v1789 = vpop.permute.xlu0 %1788
      %1790 = vset.pattern.permute.xlu0 0
      %1791 = vperm.xlu0 %1790, %v1666
      %v1792 = vpop.permute.xlu0 %1791
      %1793 = vset.pattern.permute.xlu0 0
      %1794 = vperm.xlu0 %1793, %v1667
      %v1795 = vpop.permute.xlu0 %1794
      %v1796 = vperm.slane %v1702, %v368
      %v1797 = vadd.s32 %v368, 4294967288
      %v1798 = vperm.slane %v1705, %v1797
      %vm1799 = vcmask 130112
      %v1800 = vsel %vm1799, %v1798, %v1796
      %v1801 = vperm.slane %v1708, %v368
      %v1802 = vperm.slane %v1711, %v1797
      %v1803 = vsel %vm1799, %v1802, %v1801
      %v1804 = vperm.slane %v1714, %v368
      %v1805 = vperm.slane %v1717, %v1797
      %v1806 = vsel %vm1799, %v1805, %v1804
      %v1807 = vperm.slane %v1720, %v368
      %v1808 = vperm.slane %v1723, %v1797
      %v1809 = vsel %vm1799, %v1808, %v1807
      %v1810 = vperm.slane %v1726, %v368
      %v1811 = vperm.slane %v1729, %v1797
      %v1812 = vsel %vm1799, %v1811, %v1810
      %v1813 = vperm.slane %v1732, %v368
      %v1814 = vperm.slane %v1735, %v1797
      %v1815 = vsel %vm1799, %v1814, %v1813
      %v1816 = vperm.slane %v1738, %v368
      %v1817 = vperm.slane %v1741, %v1797
      %v1818 = vsel %vm1799, %v1817, %v1816
      %v1819 = vperm.slane %v1744, %v368
      %v1820 = vperm.slane %v1747, %v1797
      %v1821 = vsel %vm1799, %v1820, %v1819
      %v1822 = vperm.slane %v1750, %v368
      %v1823 = vperm.slane %v1753, %v1797
      %v1824 = vsel %vm1799, %v1823, %v1822
      %v1825 = vperm.slane %v1756, %v368
      %v1826 = vperm.slane %v1759, %v1797
      %v1827 = vsel %vm1799, %v1826, %v1825
      %v1828 = vperm.slane %v1762, %v368
      %v1829 = vperm.slane %v1765, %v1797
      %v1830 = vsel %vm1799, %v1829, %v1828
      %v1831 = vperm.slane %v1768, %v368
      %v1832 = vperm.slane %v1771, %v1797
      %v1833 = vsel %vm1799, %v1832, %v1831
      %v1834 = vperm.slane %v1774, %v368
      %v1835 = vperm.slane %v1777, %v1797
      %v1836 = vsel %vm1799, %v1835, %v1834
      %v1837 = vperm.slane %v1780, %v368
      %v1838 = vperm.slane %v1783, %v1797
      %v1839 = vsel %vm1799, %v1838, %v1837
      %v1840 = vperm.slane %v1786, %v368
      %v1841 = vperm.slane %v1789, %v1797
      %v1842 = vsel %vm1799, %v1841, %v1840
      %v1843 = vperm.slane %v1792, %v368
      %v1844 = vperm.slane %v1795, %v1797
      %v1845 = vsel %vm1799, %v1844, %v1843
      %vm1846 = vcmask 1041409
      %v1847 = vsel %vm1846, %v1803, %v1800
      %vm1848 = vcmask 1042434
      %v1849 = vsel %vm1848, %v1806, %v1847
      %vm1850 = vcmask 1043459
      %v1851 = vsel %vm1850, %v1809, %v1849
      %vm1852 = vcmask 1044484
      %v1853 = vsel %vm1852, %v1812, %v1851
      %vm1854 = vcmask 1045509
      %v1855 = vsel %vm1854, %v1815, %v1853
      %vm1856 = vcmask 1046534
      %v1857 = vsel %vm1856, %v1818, %v1855
      %vm1858 = vcmask 1047559
      %v1859 = vsel %vm1858, %v1821, %v1857
      %v1860 = vsel %vm1846, %v1827, %v1824
      %v1861 = vsel %vm1848, %v1830, %v1860
      %v1862 = vsel %vm1850, %v1833, %v1861
      %v1863 = vsel %vm1852, %v1836, %v1862
      %v1864 = vsel %vm1854, %v1839, %v1863
      %v1865 = vsel %vm1856, %v1842, %v1864
      %v1866 = vsel %vm1858, %v1845, %v1865
      %vm1869 = vcmask 130048
      %1870 = vst.msk [vmem:[%s270] sm:$0xff] %vm1869, %v1859
      %1871 = vst.msk [vmem:[%s270 + $0x8] sm:$0xff] %vm1869, %v1866
      %s1872 = smul.u32 2, %s16
      %p1873 = scmp.lt.s32.totalorder %s1872, 3
      %s1874 = scalar_select %p1873, %s1872, 3
      %s1875 = smul.addr %s1874, 8
      %s1876 = scalar_lea.vmem %s5, %s1875
      // Predicated region
      $region41: #{tpu_custom_call.1} parent=39 // pred_check
        %p1877 = pneg %p154
      $region42: #{tpu_custom_call.1} parent=39 // pred_check_branch
        %1879 = sbr.rel (%p1877) target = $region44
      $region43: #{tpu_custom_call.1} parent=39 // pred_region
        %s1880 = smul.u32 2, %s16
      $region44: #{tpu_custom_call.1} parent=39 // pred_fallthru
        _
    $region40: #{tpu_custom_call.1} parent=5 // pred_fallthru
      _
    %p1881 = scmp.le.s32.totalorder 2, %s11
    // Predicated region
    $region45: #{tpu_custom_call.1} parent=5 // pred_check
      %p1882 = pneg %p1881
    $region46: #{tpu_custom_call.1} parent=5 // pred_check_branch
      %1884 = sbr.rel (%p1882) target = $region48
    $region47: #{tpu_custom_call.1} parent=5 // pred_region
      %s1885 = ssub.s32 %s11, 2
      // Predicated region
      $region49: #{tpu_custom_call.1} parent=47 // pred_check
        %p1886 = pneg %p160
      $region50: #{tpu_custom_call.1} parent=47 // pred_check_branch
        %1888 = sbr.rel (%p1886) target = $region52
      $region51: #{tpu_custom_call.1} parent=47 // pred_region
        %s1889 = smul.u32 2, %s17
        %p1890 = scmp.lt.s32.totalorder %s1889, 3
        %s1891 = scalar_select %p1890, %s1889, 3
        %s1892 = smul.addr %s1891, 8
        %s1893 = scalar_lea.vmem %s5, %s1892
      $region52: #{tpu_custom_call.1} parent=47 // pred_fallthru
        _
    $region48: #{tpu_custom_call.1} parent=5 // pred_fallthru
      _
  $region6: #{tpu_custom_call.1} parent=0 // loop_footer
    %s15 = sadd.s32 1, %s11
  $region7: #{tpu_custom_call.1} parent=0 // loop_footer_branch
    %10 = sbr.rel target = $region3
  $region8: #{tpu_custom_call.1} parent=0 // loop_exit
    _

</llo_original>
